<compile_context>
chip_gen: v7x
topology: tpu7x:2x2x1
jax: 0.10.0
libtpu: 0.0.40
codegen_flags: <defaults>
</compile_context>

<pallas_src>
import jax
import jax.numpy as jnp
from jax.experimental import pallas as pl
from jax.experimental.pallas import tpu as pltpu

# ---------------- model config (small, consistent with the module) -----------
NUM_CLASSES = 2
VOCAB_SIZE  = 50
EMB_DIM     = 16
NHID        = 32
BATCH       = 2
SEQ         = 8


# ---------------- Pallas kernel ----------------------------------------------
def lstm_disc_kernel(tok_ref, emb_ref, wih_ref, whh_ref, b_ref,
                     wout_ref, bout_ref, out_ref):
    """Whole forward pass in one invocation: gather -> LSTM -> linear -> log_softmax."""
    SB = tok_ref.shape[0]          # S*B (time-major)
    V  = emb_ref.shape[0]
    H  = whh_ref.shape[0]
    B  = out_ref.shape[0]
    S  = SB // B

    # ---- embedding gather as a one-hot matmul (stays on MXU, no HBM gather) --
    tok = tok_ref[...]                                            # (S*B, 1) int32
    col = jax.lax.broadcasted_iota(jnp.int32, (SB, V), 1)         # (S*B, V)
    onehot = (col == tok).astype(jnp.float32)                     # exact 0/1
    x_all = jnp.dot(onehot, emb_ref[...],
                    preferred_element_type=jnp.float32)           # (S*B, E)

    # ---- hoisted input projection: one batched matmul for ALL time steps ----
    xp_all = (jnp.dot(x_all, wih_ref[...],
                      preferred_element_type=jnp.float32)
              + b_ref[...])                                       # (S*B, 4H)

    whh = whh_ref[...]                                            # (H, 4H)
    h = jnp.zeros((B, H), jnp.float32)
    c = jnp.zeros((B, H), jnp.float32)

    # ---- fully unrolled recurrence (S static) — only h @ W_hh per step ------
    for t in range(S):
        gates = xp_all[t * B:(t + 1) * B, :] + jnp.dot(
            h, whh, preferred_element_type=jnp.float32)           # (B, 4H)
        # PyTorch LSTM gate order: i, f, g, o
        i = jax.nn.sigmoid(gates[:, 0 * H:1 * H])
        f = jax.nn.sigmoid(gates[:, 1 * H:2 * H])
        g = jnp.tanh(gates[:, 2 * H:3 * H])
        o = jax.nn.sigmoid(gates[:, 3 * H:4 * H])
        c = f * c + i * g
        h = o * jnp.tanh(c)

    # ---- classifier head + log_softmax on the last hidden state -------------
    logits = (jnp.dot(h, wout_ref[...], preferred_element_type=jnp.float32)
              + bout_ref[...])                                    # (B, C)
    m = jnp.max(logits, axis=-1, keepdims=True)
    lse = jnp.log(jnp.sum(jnp.exp(logits - m), axis=-1, keepdims=True)) + m
    out_ref[...] = logits - lse                                   # log_softmax


# ---------------- wrapper ------------------------------------------------------
def lstm_discriminator_forward(x_tokens, params):
    """x_tokens: (B, S) int32. Returns (B, NUM_CLASSES) log-probabilities."""
    emb_table = params["emb"]                    # (V, E)
    w_ih_t    = params["w_ih_t"]                 # (E, 4H)
    w_hh_t    = params["w_hh_t"]                 # (H, 4H)
    b_gates   = params["b_gates"]                # (1, 4H)
    w_out_t   = params["w_out_t"]                # (H, C)
    b_out     = params["b_out"]                  # (1, C)

    B, S = x_tokens.shape
    V, E = emb_table.shape
    H = w_hh_t.shape[0]
    C = w_out_t.shape[1]

    # (B, S) -> time-major column of token ids: row t*B + b is token (b, t).
    # This is 64 bytes of int32 — negligible wrapper glue.
    tok_col = x_tokens.T.reshape(S * B, 1).astype(jnp.int32)

    grid_spec = pltpu.PrefetchScalarGridSpec(
        num_scalar_prefetch=0,
        grid=(1,),                                   # single invocation
        in_specs=[
            pl.BlockSpec((S * B, 1), lambda i: (0, 0)),   # token ids
            pl.BlockSpec((V, E),     lambda i: (0, 0)),   # embedding table
            pl.BlockSpec((E, 4 * H), lambda i: (0, 0)),   # W_ih^T
            pl.BlockSpec((H, 4 * H), lambda i: (0, 0)),   # W_hh^T
            pl.BlockSpec((1, 4 * H), lambda i: (0, 0)),   # b_ih + b_hh
            pl.BlockSpec((H, C),     lambda i: (0, 0)),   # W_out^T
            pl.BlockSpec((1, C),     lambda i: (0, 0)),   # b_out
        ],
        out_specs=pl.BlockSpec((B, C), lambda i: (0, 0)),
    )

    return pl.pallas_call(
        lstm_disc_kernel,
        out_shape=jax.ShapeDtypeStruct((B, C), jnp.float32),
        grid_spec=grid_spec,
        compiler_params=pltpu.CompilerParams(
            dimension_semantics=("arbitrary",)),
    )(tok_col, emb_table, w_ih_t, w_hh_t, b_gates, w_out_t, b_out)


# ---------------- pure-JAX reference (for correctness check) -----------------
def reference_forward(x_tokens, params):
    emb = jnp.take(params["emb"], x_tokens, axis=0)      # (B, S, E)
    B, S, E = emb.shape
    H = params["w_hh_t"].shape[0]
    h = jnp.zeros((B, H), jnp.float32)
    c = jnp.zeros((B, H), jnp.float32)
    for t in range(S):
        gates = emb[:, t] @ params["w_ih_t"] + h @ params["w_hh_t"] + params["b_gates"]
        i = jax.nn.sigmoid(gates[:, 0 * H:1 * H])
        f = jax.nn.sigmoid(gates[:, 1 * H:2 * H])
        g = jnp.tanh(gates[:, 2 * H:3 * H])
        o = jax.nn.sigmoid(gates[:, 3 * H:4 * H])
        c = f * c + i * g
        h = o * jnp.tanh(c)
    logits = h @ params["w_out_t"] + params["b_out"]
    return jax.nn.log_softmax(logits, axis=-1)


# ---------------- deterministic parameter init --------------------------------
def init_params(key):
    ks = jax.random.split(key, 7)
    scale = 0.1
    emb    = scale * jax.random.normal(ks[0], (VOCAB_SIZE, EMB_DIM), jnp.float32)
    w_ih   = scale * jax.random.normal(ks[1], (4 * NHID, EMB_DIM), jnp.float32)
    w_hh   = scale * jax.random.normal(ks[2], (4 * NHID, NHID), jnp.float32)
    b_ih   = scale * jax.random.normal(ks[3], (4 * NHID,), jnp.float32)
    b_hh   = scale * jax.random.normal(ks[4], (4 * NHID,), jnp.float32)
    w_out  = scale * jax.random.normal(ks[5], (NUM_CLASSES, NHID), jnp.float32)
    b_out  = scale * jax.random.normal(ks[6], (NUM_CLASSES,), jnp.float32)
    return {
        "emb": emb,
        "w_ih_t": w_ih.T,                               # (E, 4H)
        "w_hh_t": w_hh.T,                               # (H, 4H)
        "b_gates": (b_ih + b_hh)[None, :],              # (1, 4H)
        "w_out_t": w_out.T,                             # (H, C)
        "b_out": b_out[None, :],                        # (1, C)
    }


if __name__ == "__main__":
    key = jax.random.PRNGKey(0)
    pkey, xkey = jax.random.split(key)
    params = init_params(pkey)
    x = jax.random.randint(xkey, (BATCH, SEQ), 0, VOCAB_SIZE, dtype=jnp.int32)

    scores = lstm_discriminator_forward(x, params)
    scores = jax.block_until_ready(scores)

    ref = reference_forward(x, params)
    assert scores.shape == (BATCH, NUM_CLASSES)
    assert jnp.allclose(scores, ref, atol=1e-4, rtol=1e-4), "mismatch vs reference"
    print("KERNEL_OK")
</pallas_src>

<mosaic_0001>
module attributes {stable_mosaic.version = 11 : i64} {
  func.func @lstm_disc_kernel(%arg0: i32, %arg1: memref<16x1xi32, #tpu.memory_space<vmem>>, %arg2: memref<50x16xf32, #tpu.memory_space<vmem>>, %arg3: memref<16x128xf32, #tpu.memory_space<vmem>>, %arg4: memref<32x128xf32, #tpu.memory_space<vmem>>, %arg5: memref<1x128xf32, #tpu.memory_space<vmem>>, %arg6: memref<32x2xf32, #tpu.memory_space<vmem>>, %arg7: memref<1x2xf32, #tpu.memory_space<vmem>>, %arg8: memref<2x2xf32, #tpu.memory_space<vmem>>) attributes {dimension_semantics = [#tpu.dimension_semantics<arbitrary>], iteration_bounds = array<i64: 1>, scalar_prefetch = 0 : i64, scratch_operands = 0 : i64, tpu.core_type = #tpu.core_type<tc>, window_params = [{pipeline_mode = #tpu.pipeline_mode<synchronous>, transform_indices = @transform_0, window_bounds = array<i64: 16, 1>}, {pipeline_mode = #tpu.pipeline_mode<synchronous>, transform_indices = @transform_1, window_bounds = array<i64: 50, 16>}, {pipeline_mode = #tpu.pipeline_mode<synchronous>, transform_indices = @transform_2, window_bounds = array<i64: 16, 128>}, {pipeline_mode = #tpu.pipeline_mode<synchronous>, transform_indices = @transform_3, window_bounds = array<i64: 32, 128>}, {pipeline_mode = #tpu.pipeline_mode<synchronous>, transform_indices = @transform_4, window_bounds = array<i64: 1, 128>}, {pipeline_mode = #tpu.pipeline_mode<synchronous>, transform_indices = @transform_5, window_bounds = array<i64: 32, 2>}, {pipeline_mode = #tpu.pipeline_mode<synchronous>, transform_indices = @transform_6, window_bounds = array<i64: 1, 2>}, {pipeline_mode = #tpu.pipeline_mode<synchronous>, transform_indices = @transform_7, window_bounds = array<i64: 2, 2>}]} {
    %c0 = arith.constant 0 : index
    %c0_0 = arith.constant 0 : index
    %0 = vector.load %arg1[%c0, %c0_0] : memref<16x1xi32, #tpu.memory_space<vmem>>, vector<16x1xi32>
    %1 = tpu.iota {dimensions = array<i32: 1>} : vector<16x50xi32>
    %2 = vector.broadcast %0 : vector<16x1xi32> to vector<16x50xi32>
    %3 = arith.cmpi eq, %1, %2 : vector<16x50xi32>
    %4 = arith.extui %3 : vector<16x50xi1> to vector<16x50xi32>
    %5 = arith.sitofp %4 : vector<16x50xi32> to vector<16x50xf32>
    %c0_1 = arith.constant 0 : index
    %c0_2 = arith.constant 0 : index
    %6 = vector.load %arg2[%c0_1, %c0_2] : memref<50x16xf32, #tpu.memory_space<vmem>>, vector<50x16xf32>
    %cst = arith.constant dense<0.000000e+00> : vector<16x16xf32>
    %7 = tpu.matmul %5, %6, %cst {dimension_numbers = #tpu.dot_dimension_numbers<[1], [0], [0], [1], [0, 0, 1, 1], [], []>} : vector<16x50xf32>, vector<50x16xf32>, vector<16x16xf32> -> vector<16x16xf32>
    %c0_3 = arith.constant 0 : index
    %c0_4 = arith.constant 0 : index
    %8 = vector.load %arg3[%c0_3, %c0_4] : memref<16x128xf32, #tpu.memory_space<vmem>>, vector<16x128xf32>
    %cst_5 = arith.constant dense<0.000000e+00> : vector<16x128xf32>
    %9 = tpu.matmul %7, %8, %cst_5 {dimension_numbers = #tpu.dot_dimension_numbers<[1], [0], [0], [1], [0, 0, 1, 1], [], []>} : vector<16x16xf32>, vector<16x128xf32>, vector<16x128xf32> -> vector<16x128xf32>
    %c0_6 = arith.constant 0 : index
    %c0_7 = arith.constant 0 : index
    %10 = vector.load %arg5[%c0_6, %c0_7] : memref<1x128xf32, #tpu.memory_space<vmem>>, vector<1x128xf32>
    %11 = vector.broadcast %10 : vector<1x128xf32> to vector<16x128xf32>
    %12 = arith.addf %9, %11 : vector<16x128xf32>
    %c0_8 = arith.constant 0 : index
    %c0_9 = arith.constant 0 : index
    %13 = vector.load %arg4[%c0_8, %c0_9] : memref<32x128xf32, #tpu.memory_space<vmem>>, vector<32x128xf32>
    %cst_10 = arith.constant 0.000000e+00 : f32
    %14 = vector.broadcast %cst_10 : f32 to vector<2x32xf32>
    %cst_11 = arith.constant 0.000000e+00 : f32
    %15 = vector.broadcast %cst_11 : f32 to vector<2x32xf32>
    %16 = vector.extract_strided_slice %12 {offsets = [0, 0], sizes = [2, 128], strides = [1, 1]} : vector<16x128xf32> to vector<2x128xf32>
    %cst_12 = arith.constant dense<0.000000e+00> : vector<2x128xf32>
    %17 = tpu.matmul %14, %13, %cst_12 {dimension_numbers = #tpu.dot_dimension_numbers<[1], [0], [0], [1], [0, 0, 1, 1], [], []>} : vector<2x32xf32>, vector<32x128xf32>, vector<2x128xf32> -> vector<2x128xf32>
    %18 = arith.addf %16, %17 : vector<2x128xf32>
    %19 = vector.extract_strided_slice %18 {offsets = [0, 0], sizes = [2, 32], strides = [1, 1]} : vector<2x128xf32> to vector<2x32xf32>
    %20 = arith.negf %19 : vector<2x32xf32>
    %21 = math.exp %20 : vector<2x32xf32>
    %cst_13 = arith.constant 1.000000e+00 : f32
    %22 = vector.broadcast %cst_13 : f32 to vector<2x32xf32>
    %23 = arith.addf %22, %21 : vector<2x32xf32>
    %24 = arith.divf %22, %23 : vector<2x32xf32>
    %25 = vector.extract_strided_slice %18 {offsets = [0, 32], sizes = [2, 32], strides = [1, 1]} : vector<2x128xf32> to vector<2x32xf32>
    %26 = arith.negf %25 : vector<2x32xf32>
    %27 = math.exp %26 : vector<2x32xf32>
    %cst_14 = arith.constant 1.000000e+00 : f32
    %28 = vector.broadcast %cst_14 : f32 to vector<2x32xf32>
    %29 = arith.addf %28, %27 : vector<2x32xf32>
    %30 = arith.divf %28, %29 : vector<2x32xf32>
    %31 = vector.extract_strided_slice %18 {offsets = [0, 64], sizes = [2, 32], strides = [1, 1]} : vector<2x128xf32> to vector<2x32xf32>
    %32 = math.tanh %31 : vector<2x32xf32>
    %33 = vector.extract_strided_slice %18 {offsets = [0, 96], sizes = [2, 32], strides = [1, 1]} : vector<2x128xf32> to vector<2x32xf32>
    %34 = arith.negf %33 : vector<2x32xf32>
    %35 = math.exp %34 : vector<2x32xf32>
    %cst_15 = arith.constant 1.000000e+00 : f32
    %36 = vector.broadcast %cst_15 : f32 to vector<2x32xf32>
    %37 = arith.addf %36, %35 : vector<2x32xf32>
    %38 = arith.divf %36, %37 : vector<2x32xf32>
    %39 = arith.mulf %30, %15 : vector<2x32xf32>
    %40 = arith.mulf %24, %32 : vector<2x32xf32>
    %41 = arith.addf %39, %40 : vector<2x32xf32>
    %42 = math.tanh %41 : vector<2x32xf32>
    %43 = arith.mulf %38, %42 : vector<2x32xf32>
    %44 = vector.extract_strided_slice %12 {offsets = [2, 0], sizes = [2, 128], strides = [1, 1]} : vector<16x128xf32> to vector<2x128xf32>
    %cst_16 = arith.constant dense<0.000000e+00> : vector<2x128xf32>
    %45 = tpu.matmul %43, %13, %cst_16 {dimension_numbers = #tpu.dot_dimension_numbers<[1], [0], [0], [1], [0, 0, 1, 1], [], []>} : vector<2x32xf32>, vector<32x128xf32>, vector<2x128xf32> -> vector<2x128xf32>
    %46 = arith.addf %44, %45 : vector<2x128xf32>
    %47 = vector.extract_strided_slice %46 {offsets = [0, 0], sizes = [2, 32], strides = [1, 1]} : vector<2x128xf32> to vector<2x32xf32>
    %48 = arith.negf %47 : vector<2x32xf32>
    %49 = math.exp %48 : vector<2x32xf32>
    %cst_17 = arith.constant 1.000000e+00 : f32
    %50 = vector.broadcast %cst_17 : f32 to vector<2x32xf32>
    %51 = arith.addf %50, %49 : vector<2x32xf32>
    %52 = arith.divf %50, %51 : vector<2x32xf32>
    %53 = vector.extract_strided_slice %46 {offsets = [0, 32], sizes = [2, 32], strides = [1, 1]} : vector<2x128xf32> to vector<2x32xf32>
    %54 = arith.negf %53 : vector<2x32xf32>
    %55 = math.exp %54 : vector<2x32xf32>
    %cst_18 = arith.constant 1.000000e+00 : f32
    %56 = vector.broadcast %cst_18 : f32 to vector<2x32xf32>
    %57 = arith.addf %56, %55 : vector<2x32xf32>
    %58 = arith.divf %56, %57 : vector<2x32xf32>
    %59 = vector.extract_strided_slice %46 {offsets = [0, 64], sizes = [2, 32], strides = [1, 1]} : vector<2x128xf32> to vector<2x32xf32>
    %60 = math.tanh %59 : vector<2x32xf32>
    %61 = vector.extract_strided_slice %46 {offsets = [0, 96], sizes = [2, 32], strides = [1, 1]} : vector<2x128xf32> to vector<2x32xf32>
    %62 = arith.negf %61 : vector<2x32xf32>
    %63 = math.exp %62 : vector<2x32xf32>
    %cst_19 = arith.constant 1.000000e+00 : f32
    %64 = vector.broadcast %cst_19 : f32 to vector<2x32xf32>
    %65 = arith.addf %64, %63 : vector<2x32xf32>
    %66 = arith.divf %64, %65 : vector<2x32xf32>
    %67 = arith.mulf %58, %41 : vector<2x32xf32>
    %68 = arith.mulf %52, %60 : vector<2x32xf32>
    %69 = arith.addf %67, %68 : vector<2x32xf32>
    %70 = math.tanh %69 : vector<2x32xf32>
    %71 = arith.mulf %66, %70 : vector<2x32xf32>
    %72 = vector.extract_strided_slice %12 {offsets = [4, 0], sizes = [2, 128], strides = [1, 1]} : vector<16x128xf32> to vector<2x128xf32>
    %cst_20 = arith.constant dense<0.000000e+00> : vector<2x128xf32>
    %73 = tpu.matmul %71, %13, %cst_20 {dimension_numbers = #tpu.dot_dimension_numbers<[1], [0], [0], [1], [0, 0, 1, 1], [], []>} : vector<2x32xf32>, vector<32x128xf32>, vector<2x128xf32> -> vector<2x128xf32>
    %74 = arith.addf %72, %73 : vector<2x128xf32>
    %75 = vector.extract_strided_slice %74 {offsets = [0, 0], sizes = [2, 32], strides = [1, 1]} : vector<2x128xf32> to vector<2x32xf32>
    %76 = arith.negf %75 : vector<2x32xf32>
    %77 = math.exp %76 : vector<2x32xf32>
    %cst_21 = arith.constant 1.000000e+00 : f32
    %78 = vector.broadcast %cst_21 : f32 to vector<2x32xf32>
    %79 = arith.addf %78, %77 : vector<2x32xf32>
    %80 = arith.divf %78, %79 : vector<2x32xf32>
    %81 = vector.extract_strided_slice %74 {offsets = [0, 32], sizes = [2, 32], strides = [1, 1]} : vector<2x128xf32> to vector<2x32xf32>
    %82 = arith.negf %81 : vector<2x32xf32>
    %83 = math.exp %82 : vector<2x32xf32>
    %cst_22 = arith.constant 1.000000e+00 : f32
    %84 = vector.broadcast %cst_22 : f32 to vector<2x32xf32>
    %85 = arith.addf %84, %83 : vector<2x32xf32>
    %86 = arith.divf %84, %85 : vector<2x32xf32>
    %87 = vector.extract_strided_slice %74 {offsets = [0, 64], sizes = [2, 32], strides = [1, 1]} : vector<2x128xf32> to vector<2x32xf32>
    %88 = math.tanh %87 : vector<2x32xf32>
    %89 = vector.extract_strided_slice %74 {offsets = [0, 96], sizes = [2, 32], strides = [1, 1]} : vector<2x128xf32> to vector<2x32xf32>
    %90 = arith.negf %89 : vector<2x32xf32>
    %91 = math.exp %90 : vector<2x32xf32>
    %cst_23 = arith.constant 1.000000e+00 : f32
    %92 = vector.broadcast %cst_23 : f32 to vector<2x32xf32>
    %93 = arith.addf %92, %91 : vector<2x32xf32>
    %94 = arith.divf %92, %93 : vector<2x32xf32>
    %95 = arith.mulf %86, %69 : vector<2x32xf32>
    %96 = arith.mulf %80, %88 : vector<2x32xf32>
    %97 = arith.addf %95, %96 : vector<2x32xf32>
    %98 = math.tanh %97 : vector<2x32xf32>
    %99 = arith.mulf %94, %98 : vector<2x32xf32>
    %100 = vector.extract_strided_slice %12 {offsets = [6, 0], sizes = [2, 128], strides = [1, 1]} : vector<16x128xf32> to vector<2x128xf32>
    %cst_24 = arith.constant dense<0.000000e+00> : vector<2x128xf32>
    %101 = tpu.matmul %99, %13, %cst_24 {dimension_numbers = #tpu.dot_dimension_numbers<[1], [0], [0], [1], [0, 0, 1, 1], [], []>} : vector<2x32xf32>, vector<32x128xf32>, vector<2x128xf32> -> vector<2x128xf32>
    %102 = arith.addf %100, %101 : vector<2x128xf32>
    %103 = vector.extract_strided_slice %102 {offsets = [0, 0], sizes = [2, 32], strides = [1, 1]} : vector<2x128xf32> to vector<2x32xf32>
    %104 = arith.negf %103 : vector<2x32xf32>
    %105 = math.exp %104 : vector<2x32xf32>
    %cst_25 = arith.constant 1.000000e+00 : f32
    %106 = vector.broadcast %cst_25 : f32 to vector<2x32xf32>
    %107 = arith.addf %106, %105 : vector<2x32xf32>
    %108 = arith.divf %106, %107 : vector<2x32xf32>
    %109 = vector.extract_strided_slice %102 {offsets = [0, 32], sizes = [2, 32], strides = [1, 1]} : vector<2x128xf32> to vector<2x32xf32>
    %110 = arith.negf %109 : vector<2x32xf32>
    %111 = math.exp %110 : vector<2x32xf32>
    %cst_26 = arith.constant 1.000000e+00 : f32
    %112 = vector.broadcast %cst_26 : f32 to vector<2x32xf32>
    %113 = arith.addf %112, %111 : vector<2x32xf32>
    %114 = arith.divf %112, %113 : vector<2x32xf32>
    %115 = vector.extract_strided_slice %102 {offsets = [0, 64], sizes = [2, 32], strides = [1, 1]} : vector<2x128xf32> to vector<2x32xf32>
    %116 = math.tanh %115 : vector<2x32xf32>
    %117 = vector.extract_strided_slice %102 {offsets = [0, 96], sizes = [2, 32], strides = [1, 1]} : vector<2x128xf32> to vector<2x32xf32>
    %118 = arith.negf %117 : vector<2x32xf32>
    %119 = math.exp %118 : vector<2x32xf32>
    %cst_27 = arith.constant 1.000000e+00 : f32
    %120 = vector.broadcast %cst_27 : f32 to vector<2x32xf32>
    %121 = arith.addf %120, %119 : vector<2x32xf32>
    %122 = arith.divf %120, %121 : vector<2x32xf32>
    %123 = arith.mulf %114, %97 : vector<2x32xf32>
    %124 = arith.mulf %108, %116 : vector<2x32xf32>
    %125 = arith.addf %123, %124 : vector<2x32xf32>
    %126 = math.tanh %125 : vector<2x32xf32>
    %127 = arith.mulf %122, %126 : vector<2x32xf32>
    %128 = vector.extract_strided_slice %12 {offsets = [8, 0], sizes = [2, 128], strides = [1, 1]} : vector<16x128xf32> to vector<2x128xf32>
    %cst_28 = arith.constant dense<0.000000e+00> : vector<2x128xf32>
    %129 = tpu.matmul %127, %13, %cst_28 {dimension_numbers = #tpu.dot_dimension_numbers<[1], [0], [0], [1], [0, 0, 1, 1], [], []>} : vector<2x32xf32>, vector<32x128xf32>, vector<2x128xf32> -> vector<2x128xf32>
    %130 = arith.addf %128, %129 : vector<2x128xf32>
    %131 = vector.extract_strided_slice %130 {offsets = [0, 0], sizes = [2, 32], strides = [1, 1]} : vector<2x128xf32> to vector<2x32xf32>
    %132 = arith.negf %131 : vector<2x32xf32>
    %133 = math.exp %132 : vector<2x32xf32>
    %cst_29 = arith.constant 1.000000e+00 : f32
    %134 = vector.broadcast %cst_29 : f32 to vector<2x32xf32>
    %135 = arith.addf %134, %133 : vector<2x32xf32>
    %136 = arith.divf %134, %135 : vector<2x32xf32>
    %137 = vector.extract_strided_slice %130 {offsets = [0, 32], sizes = [2, 32], strides = [1, 1]} : vector<2x128xf32> to vector<2x32xf32>
    %138 = arith.negf %137 : vector<2x32xf32>
    %139 = math.exp %138 : vector<2x32xf32>
    %cst_30 = arith.constant 1.000000e+00 : f32
    %140 = vector.broadcast %cst_30 : f32 to vector<2x32xf32>
    %141 = arith.addf %140, %139 : vector<2x32xf32>
    %142 = arith.divf %140, %141 : vector<2x32xf32>
    %143 = vector.extract_strided_slice %130 {offsets = [0, 64], sizes = [2, 32], strides = [1, 1]} : vector<2x128xf32> to vector<2x32xf32>
    %144 = math.tanh %143 : vector<2x32xf32>
    %145 = vector.extract_strided_slice %130 {offsets = [0, 96], sizes = [2, 32], strides = [1, 1]} : vector<2x128xf32> to vector<2x32xf32>
    %146 = arith.negf %145 : vector<2x32xf32>
    %147 = math.exp %146 : vector<2x32xf32>
    %cst_31 = arith.constant 1.000000e+00 : f32
    %148 = vector.broadcast %cst_31 : f32 to vector<2x32xf32>
    %149 = arith.addf %148, %147 : vector<2x32xf32>
    %150 = arith.divf %148, %149 : vector<2x32xf32>
    %151 = arith.mulf %142, %125 : vector<2x32xf32>
    %152 = arith.mulf %136, %144 : vector<2x32xf32>
    %153 = arith.addf %151, %152 : vector<2x32xf32>
    %154 = math.tanh %153 : vector<2x32xf32>
    %155 = arith.mulf %150, %154 : vector<2x32xf32>
    %156 = vector.extract_strided_slice %12 {offsets = [10, 0], sizes = [2, 128], strides = [1, 1]} : vector<16x128xf32> to vector<2x128xf32>
    %cst_32 = arith.constant dense<0.000000e+00> : vector<2x128xf32>
    %157 = tpu.matmul %155, %13, %cst_32 {dimension_numbers = #tpu.dot_dimension_numbers<[1], [0], [0], [1], [0, 0, 1, 1], [], []>} : vector<2x32xf32>, vector<32x128xf32>, vector<2x128xf32> -> vector<2x128xf32>
    %158 = arith.addf %156, %157 : vector<2x128xf32>
    %159 = vector.extract_strided_slice %158 {offsets = [0, 0], sizes = [2, 32], strides = [1, 1]} : vector<2x128xf32> to vector<2x32xf32>
    %160 = arith.negf %159 : vector<2x32xf32>
    %161 = math.exp %160 : vector<2x32xf32>
    %cst_33 = arith.constant 1.000000e+00 : f32
    %162 = vector.broadcast %cst_33 : f32 to vector<2x32xf32>
    %163 = arith.addf %162, %161 : vector<2x32xf32>
    %164 = arith.divf %162, %163 : vector<2x32xf32>
    %165 = vector.extract_strided_slice %158 {offsets = [0, 32], sizes = [2, 32], strides = [1, 1]} : vector<2x128xf32> to vector<2x32xf32>
    %166 = arith.negf %165 : vector<2x32xf32>
    %167 = math.exp %166 : vector<2x32xf32>
    %cst_34 = arith.constant 1.000000e+00 : f32
    %168 = vector.broadcast %cst_34 : f32 to vector<2x32xf32>
    %169 = arith.addf %168, %167 : vector<2x32xf32>
    %170 = arith.divf %168, %169 : vector<2x32xf32>
    %171 = vector.extract_strided_slice %158 {offsets = [0, 64], sizes = [2, 32], strides = [1, 1]} : vector<2x128xf32> to vector<2x32xf32>
    %172 = math.tanh %171 : vector<2x32xf32>
    %173 = vector.extract_strided_slice %158 {offsets = [0, 96], sizes = [2, 32], strides = [1, 1]} : vector<2x128xf32> to vector<2x32xf32>
    %174 = arith.negf %173 : vector<2x32xf32>
    %175 = math.exp %174 : vector<2x32xf32>
    %cst_35 = arith.constant 1.000000e+00 : f32
    %176 = vector.broadcast %cst_35 : f32 to vector<2x32xf32>
    %177 = arith.addf %176, %175 : vector<2x32xf32>
    %178 = arith.divf %176, %177 : vector<2x32xf32>
    %179 = arith.mulf %170, %153 : vector<2x32xf32>
    %180 = arith.mulf %164, %172 : vector<2x32xf32>
    %181 = arith.addf %179, %180 : vector<2x32xf32>
    %182 = math.tanh %181 : vector<2x32xf32>
    %183 = arith.mulf %178, %182 : vector<2x32xf32>
    %184 = vector.extract_strided_slice %12 {offsets = [12, 0], sizes = [2, 128], strides = [1, 1]} : vector<16x128xf32> to vector<2x128xf32>
    %cst_36 = arith.constant dense<0.000000e+00> : vector<2x128xf32>
    %185 = tpu.matmul %183, %13, %cst_36 {dimension_numbers = #tpu.dot_dimension_numbers<[1], [0], [0], [1], [0, 0, 1, 1], [], []>} : vector<2x32xf32>, vector<32x128xf32>, vector<2x128xf32> -> vector<2x128xf32>
    %186 = arith.addf %184, %185 : vector<2x128xf32>
    %187 = vector.extract_strided_slice %186 {offsets = [0, 0], sizes = [2, 32], strides = [1, 1]} : vector<2x128xf32> to vector<2x32xf32>
    %188 = arith.negf %187 : vector<2x32xf32>
    %189 = math.exp %188 : vector<2x32xf32>
    %cst_37 = arith.constant 1.000000e+00 : f32
    %190 = vector.broadcast %cst_37 : f32 to vector<2x32xf32>
    %191 = arith.addf %190, %189 : vector<2x32xf32>
    %192 = arith.divf %190, %191 : vector<2x32xf32>
    %193 = vector.extract_strided_slice %186 {offsets = [0, 32], sizes = [2, 32], strides = [1, 1]} : vector<2x128xf32> to vector<2x32xf32>
    %194 = arith.negf %193 : vector<2x32xf32>
    %195 = math.exp %194 : vector<2x32xf32>
    %cst_38 = arith.constant 1.000000e+00 : f32
    %196 = vector.broadcast %cst_38 : f32 to vector<2x32xf32>
    %197 = arith.addf %196, %195 : vector<2x32xf32>
    %198 = arith.divf %196, %197 : vector<2x32xf32>
    %199 = vector.extract_strided_slice %186 {offsets = [0, 64], sizes = [2, 32], strides = [1, 1]} : vector<2x128xf32> to vector<2x32xf32>
    %200 = math.tanh %199 : vector<2x32xf32>
    %201 = vector.extract_strided_slice %186 {offsets = [0, 96], sizes = [2, 32], strides = [1, 1]} : vector<2x128xf32> to vector<2x32xf32>
    %202 = arith.negf %201 : vector<2x32xf32>
    %203 = math.exp %202 : vector<2x32xf32>
    %cst_39 = arith.constant 1.000000e+00 : f32
    %204 = vector.broadcast %cst_39 : f32 to vector<2x32xf32>
    %205 = arith.addf %204, %203 : vector<2x32xf32>
    %206 = arith.divf %204, %205 : vector<2x32xf32>
    %207 = arith.mulf %198, %181 : vector<2x32xf32>
    %208 = arith.mulf %192, %200 : vector<2x32xf32>
    %209 = arith.addf %207, %208 : vector<2x32xf32>
    %210 = math.tanh %209 : vector<2x32xf32>
    %211 = arith.mulf %206, %210 : vector<2x32xf32>
    %212 = vector.extract_strided_slice %12 {offsets = [14, 0], sizes = [2, 128], strides = [1, 1]} : vector<16x128xf32> to vector<2x128xf32>
    %cst_40 = arith.constant dense<0.000000e+00> : vector<2x128xf32>
    %213 = tpu.matmul %211, %13, %cst_40 {dimension_numbers = #tpu.dot_dimension_numbers<[1], [0], [0], [1], [0, 0, 1, 1], [], []>} : vector<2x32xf32>, vector<32x128xf32>, vector<2x128xf32> -> vector<2x128xf32>
    %214 = arith.addf %212, %213 : vector<2x128xf32>
    %215 = vector.extract_strided_slice %214 {offsets = [0, 0], sizes = [2, 32], strides = [1, 1]} : vector<2x128xf32> to vector<2x32xf32>
    %216 = arith.negf %215 : vector<2x32xf32>
    %217 = math.exp %216 : vector<2x32xf32>
    %cst_41 = arith.constant 1.000000e+00 : f32
    %218 = vector.broadcast %cst_41 : f32 to vector<2x32xf32>
    %219 = arith.addf %218, %217 : vector<2x32xf32>
    %220 = arith.divf %218, %219 : vector<2x32xf32>
    %221 = vector.extract_strided_slice %214 {offsets = [0, 32], sizes = [2, 32], strides = [1, 1]} : vector<2x128xf32> to vector<2x32xf32>
    %222 = arith.negf %221 : vector<2x32xf32>
    %223 = math.exp %222 : vector<2x32xf32>
    %cst_42 = arith.constant 1.000000e+00 : f32
    %224 = vector.broadcast %cst_42 : f32 to vector<2x32xf32>
    %225 = arith.addf %224, %223 : vector<2x32xf32>
    %226 = arith.divf %224, %225 : vector<2x32xf32>
    %227 = vector.extract_strided_slice %214 {offsets = [0, 64], sizes = [2, 32], strides = [1, 1]} : vector<2x128xf32> to vector<2x32xf32>
    %228 = math.tanh %227 : vector<2x32xf32>
    %229 = vector.extract_strided_slice %214 {offsets = [0, 96], sizes = [2, 32], strides = [1, 1]} : vector<2x128xf32> to vector<2x32xf32>
    %230 = arith.negf %229 : vector<2x32xf32>
    %231 = math.exp %230 : vector<2x32xf32>
    %cst_43 = arith.constant 1.000000e+00 : f32
    %232 = vector.broadcast %cst_43 : f32 to vector<2x32xf32>
    %233 = arith.addf %232, %231 : vector<2x32xf32>
    %234 = arith.divf %232, %233 : vector<2x32xf32>
    %235 = arith.mulf %226, %209 : vector<2x32xf32>
    %236 = arith.mulf %220, %228 : vector<2x32xf32>
    %237 = arith.addf %235, %236 : vector<2x32xf32>
    %238 = math.tanh %237 : vector<2x32xf32>
    %239 = arith.mulf %234, %238 : vector<2x32xf32>
    %c0_44 = arith.constant 0 : index
    %c0_45 = arith.constant 0 : index
    %240 = vector.load %arg6[%c0_44, %c0_45] : memref<32x2xf32, #tpu.memory_space<vmem>>, vector<32x2xf32>
    %cst_46 = arith.constant dense<0.000000e+00> : vector<2x2xf32>
    %241 = tpu.matmul %239, %240, %cst_46 {dimension_numbers = #tpu.dot_dimension_numbers<[1], [0], [0], [1], [0, 0, 1, 1], [], []>} : vector<2x32xf32>, vector<32x2xf32>, vector<2x2xf32> -> vector<2x2xf32>
    %c0_47 = arith.constant 0 : index
    %c0_48 = arith.constant 0 : index
    %242 = vector.load %arg7[%c0_47, %c0_48] : memref<1x2xf32, #tpu.memory_space<vmem>>, vector<1x2xf32>
    %243 = vector.broadcast %242 : vector<1x2xf32> to vector<2x2xf32>
    %244 = arith.addf %241, %243 : vector<2x2xf32>
    %cst_49 = arith.constant dense<0xFF800000> : vector<2xf32>
    %245 = vector.multi_reduction <maximumf>, %244, %cst_49 [1] : vector<2x2xf32> to vector<2xf32>
    %246 = vector.shape_cast %245 : vector<2xf32> to vector<2x1xf32>
    %247 = vector.broadcast %246 : vector<2x1xf32> to vector<2x2xf32>
    %248 = arith.subf %244, %247 : vector<2x2xf32>
    %249 = math.exp %248 : vector<2x2xf32>
    %cst_50 = arith.constant dense<0.000000e+00> : vector<2xf32>
    %250 = vector.multi_reduction <add>, %249, %cst_50 [1] : vector<2x2xf32> to vector<2xf32>
    %251 = vector.shape_cast %250 : vector<2xf32> to vector<2x1xf32>
    %252 = math.log %251 : vector<2x1xf32>
    %253 = arith.addf %252, %246 : vector<2x1xf32>
    %254 = vector.broadcast %253 : vector<2x1xf32> to vector<2x2xf32>
    %255 = arith.subf %244, %254 : vector<2x2xf32>
    %c0_51 = arith.constant 0 : index
    %c0_52 = arith.constant 0 : index
    %256 = vector.load %arg8[%c0_51, %c0_52] : memref<2x2xf32, #tpu.memory_space<vmem>>, vector<2x2xf32>
    tpu.vector_store %arg8[%c0_51, %c0_52], %255 {strides = array<i32>} : memref<2x2xf32, #tpu.memory_space<vmem>>, vector<2x2xf32>,
    return
  }
  func.func @transform_0(%arg0: i32) -> (i32, i32) {
    %c0_i32 = arith.constant 0 : i32
    %c0_i32_0 = arith.constant 0 : i32
    %c0_i32_1 = arith.constant 0 : i32
    return %c0_i32, %c0_i32_0 : i32, i32
  }
  func.func @transform_1(%arg0: i32) -> (i32, i32) {
    %c0_i32 = arith.constant 0 : i32
    %c0_i32_0 = arith.constant 0 : i32
    %c0_i32_1 = arith.constant 0 : i32
    return %c0_i32, %c0_i32_0 : i32, i32
  }
  func.func @transform_2(%arg0: i32) -> (i32, i32) {
    %c0_i32 = arith.constant 0 : i32
    %c0_i32_0 = arith.constant 0 : i32
    %c0_i32_1 = arith.constant 0 : i32
    return %c0_i32, %c0_i32_0 : i32, i32
  }
  func.func @transform_3(%arg0: i32) -> (i32, i32) {
    %c0_i32 = arith.constant 0 : i32
    %c0_i32_0 = arith.constant 0 : i32
    %c0_i32_1 = arith.constant 0 : i32
    return %c0_i32, %c0_i32_0 : i32, i32
  }
  func.func @transform_4(%arg0: i32) -> (i32, i32) {
    %c0_i32 = arith.constant 0 : i32
    %c0_i32_0 = arith.constant 0 : i32
    %c0_i32_1 = arith.constant 0 : i32
    return %c0_i32, %c0_i32_0 : i32, i32
  }
  func.func @transform_5(%arg0: i32) -> (i32, i32) {
    %c0_i32 = arith.constant 0 : i32
    %c0_i32_0 = arith.constant 0 : i32
    %c0_i32_1 = arith.constant 0 : i32
    return %c0_i32, %c0_i32_0 : i32, i32
  }
  func.func @transform_6(%arg0: i32) -> (i32, i32) {
    %c0_i32 = arith.constant 0 : i32
    %c0_i32_0 = arith.constant 0 : i32
    %c0_i32_1 = arith.constant 0 : i32
    return %c0_i32, %c0_i32_0 : i32, i32
  }
  func.func @transform_7(%arg0: i32) -> (i32, i32) {
    %c0_i32 = arith.constant 0 : i32
    %c0_i32_0 = arith.constant 0 : i32
    %c0_i32_1 = arith.constant 0 : i32
    return %c0_i32, %c0_i32_0 : i32, i32
  }
}

</mosaic_0001>

<llo_original>
// kernel: tpu_custom_call.1
$region0: #{tpu_custom_call.1}
  #allocation0 [shape = 'u32[]', space=smem, size = 0x4, offset = 0x4, fixed_abs, tag = 'smem constant byte address 0x4 - core index']
  #allocation1 [shape = 'u32[144,128]{1,0:T(1,128)}', space=vmem, size = 0x12000, scoped, tag = 'internal scratch']
  %s0 = inlined_call_operand.vmem [shape: s32[16,1], index: 0, kind: input, shape index: {}]
  %s1 = inlined_call_operand.vmem [shape: f32[50,16], index: 1, kind: input, shape index: {}]
  %s2 = inlined_call_operand.vmem [shape: f32[16,128], index: 2, kind: input, shape index: {}]
  %s3 = inlined_call_operand.vmem [shape: f32[32,128], index: 3, kind: input, shape index: {}]
  %s4 = inlined_call_operand.vmem [shape: f32[1,128], index: 4, kind: input, shape index: {}]
  %s5 = inlined_call_operand.vmem [shape: f32[32,2], index: 5, kind: input, shape index: {}]
  %s6 = inlined_call_operand.vmem [shape: f32[1,2], index: 6, kind: input, shape index: {}]
  %s7 = inlined_call_operand.hbm [shape: f32[2,2], index: 7, kind: output, shape index: {}]
  %s8 = sld [smem:[#allocation0]]
  $region38: #{tpu_custom_call.1} parent=0
    _
  %s10 = ssub.s32 1, %s8
  %s11 = scalar_select 0, %s10, %s8
  $region1: #{tpu_custom_call.1} parent=0
    #allocation2 [shape = 'u8[1024]{0}', space=vmem, size = 0x400, scoped, tag = 'output window, operand 0, single buffered']
    #allocation3 [shape = 's32[1]{0}', space=sflag, size = 0x4, scoped, tag = 'scoped memory for tpu_custom_call.1']
    %12 = vsyncpa [#allocation3], 0
    // Predicated region
    $region2: #{tpu_custom_call.1} parent=1 // pred_check
      _
    $region3: #{tpu_custom_call.1} parent=1 // pred_check_branch
      %14 = sbr.rel (0) target = $region5
    $region4: #{tpu_custom_call.1} parent=1 // pred_region
      _
    $region5: #{tpu_custom_call.1} parent=1 // pred_fallthru
      _
    // Predicated region
    $region6: #{tpu_custom_call.1} parent=1 // pred_check
      _
    $region7: #{tpu_custom_call.1} parent=1 // pred_check_branch
      %16 = sbr.rel (0) target = $region9
    $region8: #{tpu_custom_call.1} parent=1 // pred_region
      _
    $region9: #{tpu_custom_call.1} parent=1 // pred_fallthru
      _
    // Predicated region
    $region10: #{tpu_custom_call.1} parent=1 // pred_check
      _
    $region11: #{tpu_custom_call.1} parent=1 // pred_check_branch
      %18 = sbr.rel (0) target = $region13
    $region12: #{tpu_custom_call.1} parent=1 // pred_region
      _
    $region13: #{tpu_custom_call.1} parent=1 // pred_fallthru
      _
    // Predicated region
    $region14: #{tpu_custom_call.1} parent=1 // pred_check
      _
    $region15: #{tpu_custom_call.1} parent=1 // pred_check_branch
      %20 = sbr.rel (0) target = $region17
    $region16: #{tpu_custom_call.1} parent=1 // pred_region
      _
    $region17: #{tpu_custom_call.1} parent=1 // pred_fallthru
      _
    // Predicated region
    $region18: #{tpu_custom_call.1} parent=1 // pred_check
      _
    $region19: #{tpu_custom_call.1} parent=1 // pred_check_branch
      %22 = sbr.rel (0) target = $region21
    $region20: #{tpu_custom_call.1} parent=1 // pred_region
      _
    $region21: #{tpu_custom_call.1} parent=1 // pred_fallthru
      _
    // Predicated region
    $region22: #{tpu_custom_call.1} parent=1 // pred_check
      _
    $region23: #{tpu_custom_call.1} parent=1 // pred_check_branch
      %24 = sbr.rel (0) target = $region25
    $region24: #{tpu_custom_call.1} parent=1 // pred_region
      _
    $region25: #{tpu_custom_call.1} parent=1 // pred_fallthru
      _
    // Predicated region
    $region26: #{tpu_custom_call.1} parent=1 // pred_check
      _
    $region27: #{tpu_custom_call.1} parent=1 // pred_check_branch
      %26 = sbr.rel (0) target = $region29
    $region28: #{tpu_custom_call.1} parent=1 // pred_region
      _
    $region29: #{tpu_custom_call.1} parent=1 // pred_fallthru
      _
    %v27 = vld [vmem:[%s0] sm:$0xff]
    %v28 = vld [vmem:[%s0 + $0x8] sm:$0xff]
    %v29 = vlaneseq
    %v30 = vand.u32 %v29, 127
    %31 = vset.pattern.permute.xlu0 0
    %32 = vperm.xlu0 %31, %v27
    %v33 = vpop.permute.xlu0 %32
    %34 = vset.pattern.permute.xlu0 0
    %35 = vperm.xlu0 %34, %v28
    %v36 = vpop.permute.xlu0 %35
    %vm37 = vcmp.eq.s32.totalorder %v30, %v33
    %vm38 = vcmp.eq.s32.totalorder %v30, %v36
    %v39 = vsel %vm37, 1, 0
    %v40 = vsel %vm38, 1, 0
    %v41 = vcvt.s32.f32 %v39
    %v42 = vcvt.s32.f32 %v40
    %v43 = vld [vmem:[%s1] sm:$0xff]
    %v44 = vld [vmem:[%s1 + $0x8] sm:$0xff]
    %v45 = vld [vmem:[%s1 + $0x10] sm:$0xff]
    %v46 = vld [vmem:[%s1 + $0x18] sm:$0xff]
    %v47 = vld [vmem:[%s1 + $0x20] sm:$0xff]
    %v48 = vld [vmem:[%s1 + $0x28] sm:$0xff]
    %v49 = vld [vmem:[%s1 + $0x30] sm:$0x3]
    %vm50 = vcmask 408576
    %v52 = vsel %vm50, %v41, 0
    %v55 = vsel %vm50, %v42, 0
    %vm57 = vcmask 1041408
    %v59 = vsel %vm57, %v49, 0
    %61 = vmatprep.subr.mxu0 0.0
    %62 = vmatpush1.msra.mxu0 %v43
    %63 = vmatprep.subr.mxu0 0.0
    %64 = vmatpush1.msra.mxu0 %v44
    %65 = vmatprep.subr.mxu0 0.0
    %66 = vmatpush1.msra.mxu0 %v45
    %67 = vmatprep.subr.mxu0 0.0
    %68 = vmatpush1.msra.mxu0 %v46
    %69 = vmatprep.subr.mxu0 0.0
    %70 = vmatpush1.msra.mxu0 %v47
    %71 = vmatprep.subr.mxu0 0.0
    %72 = vmatpush1.msra.mxu0 %v48
    %73 = vmatprep.subr.mxu0 0.0
    %74 = vmatpush1.msra.mxu0 %v59
    %75 = vmatprep.subr.mxu0 0.0
    %76 = vmatpush1.msra.mxu0 0.0
    %77 = vmatprep.subr.mxu0 0.0
    %78 = vmatpush1.msra.mxu0 0.0
    %79 = vmatprep.subr.mxu0 0.0
    %80 = vmatpush1.msra.mxu0 0.0
    %81 = vmatprep.subr.mxu0 0.0
    %82 = vmatpush1.msra.mxu0 0.0
    %83 = vmatprep.subr.mxu0 0.0
    %84 = vmatpush1.msra.mxu0 0.0
    %85 = vmatprep.subr.mxu0 0.0
    %86 = vmatpush1.msra.mxu0 0.0
    %87 = vmatprep.subr.mxu0 0.0
    %88 = vmatpush1.msra.mxu0 0.0
    %89 = vmatprep.subr.mxu0 0.0
    %90 = vmatpush1.msra.mxu0 0.0
    %91 = vmatprep.subr.mxu0 0.0
    %92 = vmatpush1.msra.mxu0 0.0
    %93 = vmatprep.subr.mxu0 0.0
    %94 = vmatpush1.msra.mxu0 0.0
    %95 = vmatprep.subr.mxu0 0.0
    %96 = vmatpush1.msra.mxu0 0.0
    %97 = vmatprep.subr.mxu0 0.0
    %98 = vmatpush1.msra.mxu0 0.0
    %99 = vmatprep.subr.mxu0 0.0
    %100 = vmatpush1.msra.mxu0 0.0
    %101 = vmatprep.subr.mxu0 0.0
    %102 = vmatpush1.msra.mxu0 0.0
    %103 = vmatprep.subr.mxu0 0.0
    %104 = vmatpush1.msra.mxu0 0.0
    %105 = vmatprep.subr.mxu0 0.0
    %106 = vmatpush1.msra.mxu0 0.0
    %107 = vmatprep.subr.mxu0 0.0
    %108 = vmatpush1.msra.mxu0 0.0
    %109 = vmatprep.subr.mxu0 0.0
    %110 = vmatpush1.msra.mxu0 0.0
    %111 = vmatprep.subr.mxu0 0.0
    %112 = vmatpush1.msra.mxu0 0.0
    %113 = vmatprep.subr.mxu0 0.0
    %114 = vmatpush1.msra.mxu0 0.0
    %115 = vmatprep.subr.mxu0 0.0
    %116 = vmatpush1.msra.mxu0 0.0
    %117 = vmatprep.subr.mxu0 0.0
    %118 = vmatpush1.msra.mxu0 0.0
    %119 = vmatprep.subr.mxu0 0.0
    %120 = vmatpush1.msra.mxu0 0.0
    %121 = vmatprep.subr.mxu0 0.0
    %122 = vmatpush1.msra.mxu0 0.0
    %123 = vmatprep.subr.mxu0 0.0
    %124 = vmatpush1.msra.mxu0 0.0
    %125 = vmatprep.mubr.f32.mxu0 0.0
    %126 = vmatmul.mubr.f32.gmra.mrb[0].mxu0 %v52
    %v127 = vpop.f32.mrb[0].mxu0
    %v128 = vadd.f32 0.0, %v127
    %v129 = vpop.f32.mrb[0].mxu0
    %130 = vmatprep.mubr.f32.mxu0 0.0
    %131 = vmatmul.mubr.f32.gmra.mrb[0].mxu0 %v55
    %v132 = vpop.f32.mrb[0].mxu0
    %v133 = vadd.f32 0.0, %v132
    %v134 = vpop.f32.mrb[0].mxu0
    %135 = vdwg.mxu0
    %v136 = vld [vmem:[%s2] sm:$0xff]
    %v137 = vld [vmem:[%s2 + $0x8] sm:$0xff]
    %v138 = vld [vmem:[%s4] sm:$0x1]
    %v140 = vlaneseq
    %v141 = vshrl.u32 %v140, 7
    %v142 = vsub.s32 0, %v141
    %v143 = vrot.slane %v138, %v142
    %vm145 = vcmask 130048
    %v147 = vsel %vm145, %v128, 0
    %v150 = vsel %vm145, %v133, 0
    %152 = vmatprep.subr.mxu0 0.0
    %153 = vmatpush1.msra.mxu0 %v136
    %154 = vmatprep.subr.mxu0 0.0
    %155 = vmatpush1.msra.mxu0 %v137
    %156 = vmatprep.subr.mxu0 0.0
    %157 = vmatpush1.msra.mxu0 0.0
    %158 = vmatprep.subr.mxu0 0.0
    %159 = vmatpush1.msra.mxu0 0.0
    %160 = vmatprep.subr.mxu0 0.0
    %161 = vmatpush1.msra.mxu0 0.0
    %162 = vmatprep.subr.mxu0 0.0
    %163 = vmatpush1.msra.mxu0 0.0
    %164 = vmatprep.subr.mxu0 0.0
    %165 = vmatpush1.msra.mxu0 0.0
    %166 = vmatprep.subr.mxu0 0.0
    %167 = vmatpush1.msra.mxu0 0.0
    %168 = vmatprep.subr.mxu0 0.0
    %169 = vmatpush1.msra.mxu0 0.0
    %170 = vmatprep.subr.mxu0 0.0
    %171 = vmatpush1.msra.mxu0 0.0
    %172 = vmatprep.subr.mxu0 0.0
    %173 = vmatpush1.msra.mxu0 0.0
    %174 = vmatprep.subr.mxu0 0.0
    %175 = vmatpush1.msra.mxu0 0.0
    %176 = vmatprep.subr.mxu0 0.0
    %177 = vmatpush1.msra.mxu0 0.0
    %178 = vmatprep.subr.mxu0 0.0
    %179 = vmatpush1.msra.mxu0 0.0
    %180 = vmatprep.subr.mxu0 0.0
    %181 = vmatpush1.msra.mxu0 0.0
    %182 = vmatprep.subr.mxu0 0.0
    %183 = vmatpush1.msra.mxu0 0.0
    %184 = vmatprep.subr.mxu0 0.0
    %185 = vmatpush1.msra.mxu0 0.0
    %186 = vmatprep.subr.mxu0 0.0
    %187 = vmatpush1.msra.mxu0 0.0
    %188 = vmatprep.subr.mxu0 0.0
    %189 = vmatpush1.msra.mxu0 0.0
    %190 = vmatprep.subr.mxu0 0.0
    %191 = vmatpush1.msra.mxu0 0.0
    %192 = vmatprep.subr.mxu0 0.0
    %193 = vmatpush1.msra.mxu0 0.0
    %194 = vmatprep.subr.mxu0 0.0
    %195 = vmatpush1.msra.mxu0 0.0
    %196 = vmatprep.subr.mxu0 0.0
    %197 = vmatpush1.msra.mxu0 0.0
    %198 = vmatprep.subr.mxu0 0.0
    %199 = vmatpush1.msra.mxu0 0.0
    %200 = vmatprep.subr.mxu0 0.0
    %201 = vmatpush1.msra.mxu0 0.0
    %202 = vmatprep.subr.mxu0 0.0
    %203 = vmatpush1.msra.mxu0 0.0
    %204 = vmatprep.subr.mxu0 0.0
    %205 = vmatpush1.msra.mxu0 0.0
    %206 = vmatprep.subr.mxu0 0.0
    %207 = vmatpush1.msra.mxu0 0.0
    %208 = vmatprep.subr.mxu0 0.0
    %209 = vmatpush1.msra.mxu0 0.0
    %210 = vmatprep.subr.mxu0 0.0
    %211 = vmatpush1.msra.mxu0 0.0
    %212 = vmatprep.subr.mxu0 0.0
    %213 = vmatpush1.msra.mxu0 0.0
    %214 = vmatprep.subr.mxu0 0.0
    %215 = vmatpush1.msra.mxu0 0.0
    %216 = vmatprep.mubr.f32.mxu0 0.0
    %217 = vmatmul.mubr.f32.gmra.mrb[0].mxu0 %v147
    %v218 = vpop.f32.mrb[0].mxu0
    %v219 = vadd.f32 %v143, %v218
    %v220 = vpop.f32.mrb[0].mxu0
    %221 = vmatprep.mubr.f32.mxu0 0.0
    %222 = vmatmul.mubr.f32.gmra.mrb[0].mxu0 %v150
    %v223 = vpop.f32.mrb[0].mxu0
    %v224 = vadd.f32 %v143, %v223
    %v225 = vpop.f32.mrb[0].mxu0
    %226 = vdwg.mxu0
    %v227 = vld [vmem:[%s3] sm:$0xff]
    %v228 = vld [vmem:[%s3 + $0x8] sm:$0xff]
    %v229 = vld [vmem:[%s3 + $0x10] sm:$0xff]
    %v230 = vld [vmem:[%s3 + $0x18] sm:$0xff]
    %vm231 = vcmask 261120
    %v233 = vsel %vm231, 0.0, 0
    %235 = vmatprep.subr.mxu0 0.0
    %236 = vmatpush1.msra.mxu0 %v227
    %237 = vmatprep.subr.mxu0 0.0
    %238 = vmatpush1.msra.mxu0 %v228
    %239 = vmatprep.subr.mxu0 0.0
    %240 = vmatpush1.msra.mxu0 %v229
    %241 = vmatprep.subr.mxu0 0.0
    %242 = vmatpush1.msra.mxu0 %v230
    %243 = vmatprep.subr.mxu0 0.0
    %244 = vmatpush1.msra.mxu0 0.0
    %245 = vmatprep.subr.mxu0 0.0
    %246 = vmatpush1.msra.mxu0 0.0
    %247 = vmatprep.subr.mxu0 0.0
    %248 = vmatpush1.msra.mxu0 0.0
    %249 = vmatprep.subr.mxu0 0.0
    %250 = vmatpush1.msra.mxu0 0.0
    %251 = vmatprep.subr.mxu0 0.0
    %252 = vmatpush1.msra.mxu0 0.0
    %253 = vmatprep.subr.mxu0 0.0
    %254 = vmatpush1.msra.mxu0 0.0
    %255 = vmatprep.subr.mxu0 0.0
    %256 = vmatpush1.msra.mxu0 0.0
    %257 = vmatprep.subr.mxu0 0.0
    %258 = vmatpush1.msra.mxu0 0.0
    %259 = vmatprep.subr.mxu0 0.0
    %260 = vmatpush1.msra.mxu0 0.0
    %261 = vmatprep.subr.mxu0 0.0
    %262 = vmatpush1.msra.mxu0 0.0
    %263 = vmatprep.subr.mxu0 0.0
    %264 = vmatpush1.msra.mxu0 0.0
    %265 = vmatprep.subr.mxu0 0.0
    %266 = vmatpush1.msra.mxu0 0.0
    %267 = vmatprep.subr.mxu0 0.0
    %268 = vmatpush1.msra.mxu0 0.0
    %269 = vmatprep.subr.mxu0 0.0
    %270 = vmatpush1.msra.mxu0 0.0
    %271 = vmatprep.subr.mxu0 0.0
    %272 = vmatpush1.msra.mxu0 0.0
    %273 = vmatprep.subr.mxu0 0.0
    %274 = vmatpush1.msra.mxu0 0.0
    %275 = vmatprep.subr.mxu0 0.0
    %276 = vmatpush1.msra.mxu0 0.0
    %277 = vmatprep.subr.mxu0 0.0
    %278 = vmatpush1.msra.mxu0 0.0
    %279 = vmatprep.subr.mxu0 0.0
    %280 = vmatpush1.msra.mxu0 0.0
    %281 = vmatprep.subr.mxu0 0.0
    %282 = vmatpush1.msra.mxu0 0.0
    %283 = vmatprep.subr.mxu0 0.0
    %284 = vmatpush1.msra.mxu0 0.0
    %285 = vmatprep.subr.mxu0 0.0
    %286 = vmatpush1.msra.mxu0 0.0
    %287 = vmatprep.subr.mxu0 0.0
    %288 = vmatpush1.msra.mxu0 0.0
    %289 = vmatprep.subr.mxu0 0.0
    %290 = vmatpush1.msra.mxu0 0.0
    %291 = vmatprep.subr.mxu0 0.0
    %292 = vmatpush1.msra.mxu0 0.0
    %293 = vmatprep.subr.mxu0 0.0
    %294 = vmatpush1.msra.mxu0 0.0
    %295 = vmatprep.subr.mxu0 0.0
    %296 = vmatpush1.msra.mxu0 0.0
    %297 = vmatprep.subr.mxu0 0.0
    %298 = vmatpush1.msra.mxu0 0.0
    %299 = vmatprep.mubr.f32.mxu0 0.0
    %300 = vmatmul.mubr.f32.gmra.mrb[0].mxu0 %v233
    %v301 = vpop.f32.mrb[0].mxu0
    %v302 = vadd.f32 0.0, %v301
    %v303 = vpop.f32.mrb[0].mxu0
    %304 = vdwg.mxu0
    %v305 = vadd.f32 %v219, %v302
    %v306 = vxor.u32 %v305, 2147483648
    %v307 = vmul.f32 %v306, 1.442695
    %v308 = vpow.pop %v307
    %v309 = vadd.f32 %v308, 1.0
    %v310 = vrcp.pop %v309
    %v311 = vmul.f32 1.0, %v310
    %v312 = vtanh.pop %v305
    %v313 = vmul.f32 %v311, 0.0
    %315 = vrot.lane.b32.xlu0 %v312, 64
    %v316 = vpop.permute.xlu0 %315
    %v318 = vmul.f32 %v311, %v316
    %320 = vrot.lane.b32.xlu0 %v318, 32
    %v321 = vpop.permute.xlu0 %320
    %v323 = vadd.f32 %v313, %v321
    %v324 = vtanh.pop %v323
    %326 = vrot.lane.b32.xlu0 %v324, 64
    %v327 = vpop.permute.xlu0 %326
    %v329 = vmul.f32 %v311, %v327
    %331 = vrot.lane.b32.xlu0 %v329, 32
    %v332 = vpop.permute.xlu0 %331
    %v333 = vsel %vm231, %v332, 0
    %335 = vmatprep.subr.mxu0 0.0
    %336 = vmatpush1.msra.mxu0 %v227
    %337 = vmatprep.subr.mxu0 0.0
    %338 = vmatpush1.msra.mxu0 %v228
    %339 = vmatprep.subr.mxu0 0.0
    %340 = vmatpush1.msra.mxu0 %v229
    %341 = vmatprep.subr.mxu0 0.0
    %342 = vmatpush1.msra.mxu0 %v230
    %343 = vmatprep.subr.mxu0 0.0
    %344 = vmatpush1.msra.mxu0 0.0
    %345 = vmatprep.subr.mxu0 0.0
    %346 = vmatpush1.msra.mxu0 0.0
    %347 = vmatprep.subr.mxu0 0.0
    %348 = vmatpush1.msra.mxu0 0.0
    %349 = vmatprep.subr.mxu0 0.0
    %350 = vmatpush1.msra.mxu0 0.0
    %351 = vmatprep.subr.mxu0 0.0
    %352 = vmatpush1.msra.mxu0 0.0
    %353 = vmatprep.subr.mxu0 0.0
    %354 = vmatpush1.msra.mxu0 0.0
    %355 = vmatprep.subr.mxu0 0.0
    %356 = vmatpush1.msra.mxu0 0.0
    %357 = vmatprep.subr.mxu0 0.0
    %358 = vmatpush1.msra.mxu0 0.0
    %359 = vmatprep.subr.mxu0 0.0
    %360 = vmatpush1.msra.mxu0 0.0
    %361 = vmatprep.subr.mxu0 0.0
    %362 = vmatpush1.msra.mxu0 0.0
    %363 = vmatprep.subr.mxu0 0.0
    %364 = vmatpush1.msra.mxu0 0.0
    %365 = vmatprep.subr.mxu0 0.0
    %366 = vmatpush1.msra.mxu0 0.0
    %367 = vmatprep.subr.mxu0 0.0
    %368 = vmatpush1.msra.mxu0 0.0
    %369 = vmatprep.subr.mxu0 0.0
    %370 = vmatpush1.msra.mxu0 0.0
    %371 = vmatprep.subr.mxu0 0.0
    %372 = vmatpush1.msra.mxu0 0.0
    %373 = vmatprep.subr.mxu0 0.0
    %374 = vmatpush1.msra.mxu0 0.0
    %375 = vmatprep.subr.mxu0 0.0
    %376 = vmatpush1.msra.mxu0 0.0
    %377 = vmatprep.subr.mxu0 0.0
    %378 = vmatpush1.msra.mxu0 0.0
    %379 = vmatprep.subr.mxu0 0.0
    %380 = vmatpush1.msra.mxu0 0.0
    %381 = vmatprep.subr.mxu0 0.0
    %382 = vmatpush1.msra.mxu0 0.0
    %383 = vmatprep.subr.mxu0 0.0
    %384 = vmatpush1.msra.mxu0 0.0
    %385 = vmatprep.subr.mxu0 0.0
    %386 = vmatpush1.msra.mxu0 0.0
    %387 = vmatprep.subr.mxu0 0.0
    %388 = vmatpush1.msra.mxu0 0.0
    %389 = vmatprep.subr.mxu0 0.0
    %390 = vmatpush1.msra.mxu0 0.0
    %391 = vmatprep.subr.mxu0 0.0
    %392 = vmatpush1.msra.mxu0 0.0
    %393 = vmatprep.subr.mxu0 0.0
    %394 = vmatpush1.msra.mxu0 0.0
    %395 = vmatprep.subr.mxu0 0.0
    %396 = vmatpush1.msra.mxu0 0.0
    %397 = vmatprep.subr.mxu0 0.0
    %398 = vmatpush1.msra.mxu0 0.0
    %399 = vmatprep.mubr.f32.mxu0 0.0
    %400 = vmatmul.mubr.f32.gmra.mrb[0].mxu0 %v333
    %v401 = vpop.f32.mrb[0].mxu0
    %v402 = vadd.f32 0.0, %v401
    %v403 = vpop.f32.mrb[0].mxu0
    %404 = vdwg.mxu0
    %v406 = vrot.slane %v402, 6
    %v408 = vadd.f32 %v219, %v406
    %v409 = vxor.u32 %v408, 2147483648
    %v410 = vmul.f32 %v409, 1.442695
    %v411 = vpow.pop %v410
    %v412 = vadd.f32 %v411, 1.0
    %v413 = vrcp.pop %v412
    %v414 = vmul.f32 1.0, %v413
    %v415 = vtanh.pop %v408
    %v417 = vrot.slane %v323, 6
    %v419 = vmul.f32 %v414, %v417
    %421 = vrot.lane.b32.xlu0 %v415, 64
    %v422 = vpop.permute.xlu0 %421
    %v424 = vmul.f32 %v414, %v422
    %426 = vrot.lane.b32.xlu0 %v424, 32
    %v427 = vpop.permute.xlu0 %426
    %v429 = vadd.f32 %v419, %v427
    %v430 = vtanh.pop %v429
    %432 = vrot.lane.b32.xlu0 %v430, 64
    %v433 = vpop.permute.xlu0 %432
    %v435 = vmul.f32 %v414, %v433
    %v437 = vrot.slane %v435, 2
    %438 = vrot.lane.b32.xlu0 %v437, 32
    %v439 = vpop.permute.xlu0 %438
    %v440 = vsel %vm231, %v439, 0
    %442 = vmatprep.subr.mxu0 0.0
    %443 = vmatpush1.msra.mxu0 %v227
    %444 = vmatprep.subr.mxu0 0.0
    %445 = vmatpush1.msra.mxu0 %v228
    %446 = vmatprep.subr.mxu0 0.0
    %447 = vmatpush1.msra.mxu0 %v229
    %448 = vmatprep.subr.mxu0 0.0
    %449 = vmatpush1.msra.mxu0 %v230
    %450 = vmatprep.subr.mxu0 0.0
    %451 = vmatpush1.msra.mxu0 0.0
    %452 = vmatprep.subr.mxu0 0.0
    %453 = vmatpush1.msra.mxu0 0.0
    %454 = vmatprep.subr.mxu0 0.0
    %455 = vmatpush1.msra.mxu0 0.0
    %456 = vmatprep.subr.mxu0 0.0
    %457 = vmatpush1.msra.mxu0 0.0
    %458 = vmatprep.subr.mxu0 0.0
    %459 = vmatpush1.msra.mxu0 0.0
    %460 = vmatprep.subr.mxu0 0.0
    %461 = vmatpush1.msra.mxu0 0.0
    %462 = vmatprep.subr.mxu0 0.0
    %463 = vmatpush1.msra.mxu0 0.0
    %464 = vmatprep.subr.mxu0 0.0
    %465 = vmatpush1.msra.mxu0 0.0
    %466 = vmatprep.subr.mxu0 0.0
    %467 = vmatpush1.msra.mxu0 0.0
    %468 = vmatprep.subr.mxu0 0.0
    %469 = vmatpush1.msra.mxu0 0.0
    %470 = vmatprep.subr.mxu0 0.0
    %471 = vmatpush1.msra.mxu0 0.0
    %472 = vmatprep.subr.mxu0 0.0
    %473 = vmatpush1.msra.mxu0 0.0
    %474 = vmatprep.subr.mxu0 0.0
    %475 = vmatpush1.msra.mxu0 0.0
    %476 = vmatprep.subr.mxu0 0.0
    %477 = vmatpush1.msra.mxu0 0.0
    %478 = vmatprep.subr.mxu0 0.0
    %479 = vmatpush1.msra.mxu0 0.0
    %480 = vmatprep.subr.mxu0 0.0
    %481 = vmatpush1.msra.mxu0 0.0
    %482 = vmatprep.subr.mxu0 0.0
    %483 = vmatpush1.msra.mxu0 0.0
    %484 = vmatprep.subr.mxu0 0.0
    %485 = vmatpush1.msra.mxu0 0.0
    %486 = vmatprep.subr.mxu0 0.0
    %487 = vmatpush1.msra.mxu0 0.0
    %488 = vmatprep.subr.mxu0 0.0
    %489 = vmatpush1.msra.mxu0 0.0
    %490 = vmatprep.subr.mxu0 0.0
    %491 = vmatpush1.msra.mxu0 0.0
    %492 = vmatprep.subr.mxu0 0.0
    %493 = vmatpush1.msra.mxu0 0.0
    %494 = vmatprep.subr.mxu0 0.0
    %495 = vmatpush1.msra.mxu0 0.0
    %496 = vmatprep.subr.mxu0 0.0
    %497 = vmatpush1.msra.mxu0 0.0
    %498 = vmatprep.subr.mxu0 0.0
    %499 = vmatpush1.msra.mxu0 0.0
    %500 = vmatprep.subr.mxu0 0.0
    %501 = vmatpush1.msra.mxu0 0.0
    %502 = vmatprep.subr.mxu0 0.0
    %503 = vmatpush1.msra.mxu0 0.0
    %504 = vmatprep.subr.mxu0 0.0
    %505 = vmatpush1.msra.mxu0 0.0
    %506 = vmatprep.mubr.f32.mxu0 0.0
    %507 = vmatmul.mubr.f32.gmra.mrb[0].mxu0 %v440
    %v508 = vpop.f32.mrb[0].mxu0
    %v509 = vadd.f32 0.0, %v508
    %v510 = vpop.f32.mrb[0].mxu0
    %511 = vdwg.mxu0
    %v513 = vrot.slane %v509, 4
    %v515 = vadd.f32 %v219, %v513
    %v516 = vxor.u32 %v515, 2147483648
    %v517 = vmul.f32 %v516, 1.442695
    %v518 = vpow.pop %v517
    %v519 = vadd.f32 %v518, 1.0
    %v520 = vrcp.pop %v519
    %v521 = vmul.f32 1.0, %v520
    %v522 = vtanh.pop %v515
    %v524 = vrot.slane %v429, 6
    %v526 = vmul.f32 %v521, %v524
    %528 = vrot.lane.b32.xlu0 %v522, 64
    %v529 = vpop.permute.xlu0 %528
    %v531 = vmul.f32 %v521, %v529
    %533 = vrot.lane.b32.xlu0 %v531, 32
    %v534 = vpop.permute.xlu0 %533
    %v536 = vadd.f32 %v526, %v534
    %v537 = vtanh.pop %v536
    %539 = vrot.lane.b32.xlu0 %v537, 64
    %v540 = vpop.permute.xlu0 %539
    %v542 = vmul.f32 %v521, %v540
    %v544 = vrot.slane %v542, 4
    %545 = vrot.lane.b32.xlu0 %v544, 32
    %v546 = vpop.permute.xlu0 %545
    %v547 = vsel %vm231, %v546, 0
    %549 = vmatprep.subr.mxu0 0.0
    %550 = vmatpush1.msra.mxu0 %v227
    %551 = vmatprep.subr.mxu0 0.0
    %552 = vmatpush1.msra.mxu0 %v228
    %553 = vmatprep.subr.mxu0 0.0
    %554 = vmatpush1.msra.mxu0 %v229
    %555 = vmatprep.subr.mxu0 0.0
    %556 = vmatpush1.msra.mxu0 %v230
    %557 = vmatprep.subr.mxu0 0.0
    %558 = vmatpush1.msra.mxu0 0.0
    %559 = vmatprep.subr.mxu0 0.0
    %560 = vmatpush1.msra.mxu0 0.0
    %561 = vmatprep.subr.mxu0 0.0
    %562 = vmatpush1.msra.mxu0 0.0
    %563 = vmatprep.subr.mxu0 0.0
    %564 = vmatpush1.msra.mxu0 0.0
    %565 = vmatprep.subr.mxu0 0.0
    %566 = vmatpush1.msra.mxu0 0.0
    %567 = vmatprep.subr.mxu0 0.0
    %568 = vmatpush1.msra.mxu0 0.0
    %569 = vmatprep.subr.mxu0 0.0
    %570 = vmatpush1.msra.mxu0 0.0
    %571 = vmatprep.subr.mxu0 0.0
    %572 = vmatpush1.msra.mxu0 0.0
    %573 = vmatprep.subr.mxu0 0.0
    %574 = vmatpush1.msra.mxu0 0.0
    %575 = vmatprep.subr.mxu0 0.0
    %576 = vmatpush1.msra.mxu0 0.0
    %577 = vmatprep.subr.mxu0 0.0
    %578 = vmatpush1.msra.mxu0 0.0
    %579 = vmatprep.subr.mxu0 0.0
    %580 = vmatpush1.msra.mxu0 0.0
    %581 = vmatprep.subr.mxu0 0.0
    %582 = vmatpush1.msra.mxu0 0.0
    %583 = vmatprep.subr.mxu0 0.0
    %584 = vmatpush1.msra.mxu0 0.0
    %585 = vmatprep.subr.mxu0 0.0
    %586 = vmatpush1.msra.mxu0 0.0
    %587 = vmatprep.subr.mxu0 0.0
    %588 = vmatpush1.msra.mxu0 0.0
    %589 = vmatprep.subr.mxu0 0.0
    %590 = vmatpush1.msra.mxu0 0.0
    %591 = vmatprep.subr.mxu0 0.0
    %592 = vmatpush1.msra.mxu0 0.0
    %593 = vmatprep.subr.mxu0 0.0
    %594 = vmatpush1.msra.mxu0 0.0
    %595 = vmatprep.subr.mxu0 0.0
    %596 = vmatpush1.msra.mxu0 0.0
    %597 = vmatprep.subr.mxu0 0.0
    %598 = vmatpush1.msra.mxu0 0.0
    %599 = vmatprep.subr.mxu0 0.0
    %600 = vmatpush1.msra.mxu0 0.0
    %601 = vmatprep.subr.mxu0 0.0
    %602 = vmatpush1.msra.mxu0 0.0
    %603 = vmatprep.subr.mxu0 0.0
    %604 = vmatpush1.msra.mxu0 0.0
    %605 = vmatprep.subr.mxu0 0.0
    %606 = vmatpush1.msra.mxu0 0.0
    %607 = vmatprep.subr.mxu0 0.0
    %608 = vmatpush1.msra.mxu0 0.0
    %609 = vmatprep.subr.mxu0 0.0
    %610 = vmatpush1.msra.mxu0 0.0
    %611 = vmatprep.subr.mxu0 0.0
    %612 = vmatpush1.msra.mxu0 0.0
    %613 = vmatprep.mubr.f32.mxu0 0.0
    %614 = vmatmul.mubr.f32.gmra.mrb[0].mxu0 %v547
    %v615 = vpop.f32.mrb[0].mxu0
    %v616 = vadd.f32 0.0, %v615
    %v617 = vpop.f32.mrb[0].mxu0
    %618 = vdwg.mxu0
    %v620 = vrot.slane %v616, 2
    %v622 = vadd.f32 %v219, %v620
    %v623 = vxor.u32 %v622, 2147483648
    %v624 = vmul.f32 %v623, 1.442695
    %v625 = vpow.pop %v624
    %v626 = vadd.f32 %v625, 1.0
    %v627 = vrcp.pop %v626
    %v628 = vmul.f32 1.0, %v627
    %v629 = vtanh.pop %v622
    %v631 = vrot.slane %v536, 6
    %v633 = vmul.f32 %v628, %v631
    %635 = vrot.lane.b32.xlu0 %v629, 64
    %v636 = vpop.permute.xlu0 %635
    %v638 = vmul.f32 %v628, %v636
    %640 = vrot.lane.b32.xlu0 %v638, 32
    %v641 = vpop.permute.xlu0 %640
    %v643 = vadd.f32 %v633, %v641
    %v644 = vtanh.pop %v643
    %646 = vrot.lane.b32.xlu0 %v644, 64
    %v647 = vpop.permute.xlu0 %646
    %v649 = vmul.f32 %v628, %v647
    %v651 = vrot.slane %v649, 6
    %652 = vrot.lane.b32.xlu0 %v651, 32
    %v653 = vpop.permute.xlu0 %652
    %v654 = vsel %vm231, %v653, 0
    %656 = vmatprep.subr.mxu0 0.0
    %657 = vmatpush1.msra.mxu0 %v227
    %658 = vmatprep.subr.mxu0 0.0
    %659 = vmatpush1.msra.mxu0 %v228
    %660 = vmatprep.subr.mxu0 0.0
    %661 = vmatpush1.msra.mxu0 %v229
    %662 = vmatprep.subr.mxu0 0.0
    %663 = vmatpush1.msra.mxu0 %v230
    %664 = vmatprep.subr.mxu0 0.0
    %665 = vmatpush1.msra.mxu0 0.0
    %666 = vmatprep.subr.mxu0 0.0
    %667 = vmatpush1.msra.mxu0 0.0
    %668 = vmatprep.subr.mxu0 0.0
    %669 = vmatpush1.msra.mxu0 0.0
    %670 = vmatprep.subr.mxu0 0.0
    %671 = vmatpush1.msra.mxu0 0.0
    %672 = vmatprep.subr.mxu0 0.0
    %673 = vmatpush1.msra.mxu0 0.0
    %674 = vmatprep.subr.mxu0 0.0
    %675 = vmatpush1.msra.mxu0 0.0
    %676 = vmatprep.subr.mxu0 0.0
    %677 = vmatpush1.msra.mxu0 0.0
    %678 = vmatprep.subr.mxu0 0.0
    %679 = vmatpush1.msra.mxu0 0.0
    %680 = vmatprep.subr.mxu0 0.0
    %681 = vmatpush1.msra.mxu0 0.0
    %682 = vmatprep.subr.mxu0 0.0
    %683 = vmatpush1.msra.mxu0 0.0
    %684 = vmatprep.subr.mxu0 0.0
    %685 = vmatpush1.msra.mxu0 0.0
    %686 = vmatprep.subr.mxu0 0.0
    %687 = vmatpush1.msra.mxu0 0.0
    %688 = vmatprep.subr.mxu0 0.0
    %689 = vmatpush1.msra.mxu0 0.0
    %690 = vmatprep.subr.mxu0 0.0
    %691 = vmatpush1.msra.mxu0 0.0
    %692 = vmatprep.subr.mxu0 0.0
    %693 = vmatpush1.msra.mxu0 0.0
    %694 = vmatprep.subr.mxu0 0.0
    %695 = vmatpush1.msra.mxu0 0.0
    %696 = vmatprep.subr.mxu0 0.0
    %697 = vmatpush1.msra.mxu0 0.0
    %698 = vmatprep.subr.mxu0 0.0
    %699 = vmatpush1.msra.mxu0 0.0
    %700 = vmatprep.subr.mxu0 0.0
    %701 = vmatpush1.msra.mxu0 0.0
    %702 = vmatprep.subr.mxu0 0.0
    %703 = vmatpush1.msra.mxu0 0.0
    %704 = vmatprep.subr.mxu0 0.0
    %705 = vmatpush1.msra.mxu0 0.0
    %706 = vmatprep.subr.mxu0 0.0
    %707 = vmatpush1.msra.mxu0 0.0
    %708 = vmatprep.subr.mxu0 0.0
    %709 = vmatpush1.msra.mxu0 0.0
    %710 = vmatprep.subr.mxu0 0.0
    %711 = vmatpush1.msra.mxu0 0.0
    %712 = vmatprep.subr.mxu0 0.0
    %713 = vmatpush1.msra.mxu0 0.0
    %714 = vmatprep.subr.mxu0 0.0
    %715 = vmatpush1.msra.mxu0 0.0
    %716 = vmatprep.subr.mxu0 0.0
    %717 = vmatpush1.msra.mxu0 0.0
    %718 = vmatprep.subr.mxu0 0.0
    %719 = vmatpush1.msra.mxu0 0.0
    %720 = vmatprep.mubr.f32.mxu0 0.0
    %721 = vmatmul.mubr.f32.gmra.mrb[0].mxu0 %v654
    %v722 = vpop.f32.mrb[0].mxu0
    %v723 = vadd.f32 0.0, %v722
    %v724 = vpop.f32.mrb[0].mxu0
    %725 = vdwg.mxu0
    %v726 = vadd.f32 %v224, %v723
    %v727 = vxor.u32 %v726, 2147483648
    %v728 = vmul.f32 %v727, 1.442695
    %v729 = vpow.pop %v728
    %v730 = vadd.f32 %v729, 1.0
    %v731 = vrcp.pop %v730
    %v732 = vmul.f32 1.0, %v731
    %v733 = vtanh.pop %v726
    %v735 = vrot.slane %v643, 6
    %v737 = vmul.f32 %v732, %v735
    %739 = vrot.lane.b32.xlu0 %v733, 64
    %v740 = vpop.permute.xlu0 %739
    %v742 = vmul.f32 %v732, %v740
    %744 = vrot.lane.b32.xlu0 %v742, 32
    %v745 = vpop.permute.xlu0 %744
    %v747 = vadd.f32 %v737, %v745
    %v748 = vtanh.pop %v747
    %750 = vrot.lane.b32.xlu0 %v748, 64
    %v751 = vpop.permute.xlu0 %750
    %v753 = vmul.f32 %v732, %v751
    %755 = vrot.lane.b32.xlu0 %v753, 32
    %v756 = vpop.permute.xlu0 %755
    %v757 = vsel %vm231, %v756, 0
    %759 = vmatprep.subr.mxu0 0.0
    %760 = vmatpush1.msra.mxu0 %v227
    %761 = vmatprep.subr.mxu0 0.0
    %762 = vmatpush1.msra.mxu0 %v228
    %763 = vmatprep.subr.mxu0 0.0
    %764 = vmatpush1.msra.mxu0 %v229
    %765 = vmatprep.subr.mxu0 0.0
    %766 = vmatpush1.msra.mxu0 %v230
    %767 = vmatprep.subr.mxu0 0.0
    %768 = vmatpush1.msra.mxu0 0.0
    %769 = vmatprep.subr.mxu0 0.0
    %770 = vmatpush1.msra.mxu0 0.0
    %771 = vmatprep.subr.mxu0 0.0
    %772 = vmatpush1.msra.mxu0 0.0
    %773 = vmatprep.subr.mxu0 0.0
    %774 = vmatpush1.msra.mxu0 0.0
    %775 = vmatprep.subr.mxu0 0.0
    %776 = vmatpush1.msra.mxu0 0.0
    %777 = vmatprep.subr.mxu0 0.0
    %778 = vmatpush1.msra.mxu0 0.0
    %779 = vmatprep.subr.mxu0 0.0
    %780 = vmatpush1.msra.mxu0 0.0
    %781 = vmatprep.subr.mxu0 0.0
    %782 = vmatpush1.msra.mxu0 0.0
    %783 = vmatprep.subr.mxu0 0.0
    %784 = vmatpush1.msra.mxu0 0.0
    %785 = vmatprep.subr.mxu0 0.0
    %786 = vmatpush1.msra.mxu0 0.0
    %787 = vmatprep.subr.mxu0 0.0
    %788 = vmatpush1.msra.mxu0 0.0
    %789 = vmatprep.subr.mxu0 0.0
    %790 = vmatpush1.msra.mxu0 0.0
    %791 = vmatprep.subr.mxu0 0.0
    %792 = vmatpush1.msra.mxu0 0.0
    %793 = vmatprep.subr.mxu0 0.0
    %794 = vmatpush1.msra.mxu0 0.0
    %795 = vmatprep.subr.mxu0 0.0
    %796 = vmatpush1.msra.mxu0 0.0
    %797 = vmatprep.subr.mxu0 0.0
    %798 = vmatpush1.msra.mxu0 0.0
    %799 = vmatprep.subr.mxu0 0.0
    %800 = vmatpush1.msra.mxu0 0.0
    %801 = vmatprep.subr.mxu0 0.0
    %802 = vmatpush1.msra.mxu0 0.0
    %803 = vmatprep.subr.mxu0 0.0
    %804 = vmatpush1.msra.mxu0 0.0
    %805 = vmatprep.subr.mxu0 0.0
    %806 = vmatpush1.msra.mxu0 0.0
    %807 = vmatprep.subr.mxu0 0.0
    %808 = vmatpush1.msra.mxu0 0.0
    %809 = vmatprep.subr.mxu0 0.0
    %810 = vmatpush1.msra.mxu0 0.0
    %811 = vmatprep.subr.mxu0 0.0
    %812 = vmatpush1.msra.mxu0 0.0
    %813 = vmatprep.subr.mxu0 0.0
    %814 = vmatpush1.msra.mxu0 0.0
    %815 = vmatprep.subr.mxu0 0.0
    %816 = vmatpush1.msra.mxu0 0.0
    %817 = vmatprep.subr.mxu0 0.0
    %818 = vmatpush1.msra.mxu0 0.0
    %819 = vmatprep.subr.mxu0 0.0
    %820 = vmatpush1.msra.mxu0 0.0
    %821 = vmatprep.subr.mxu0 0.0
    %822 = vmatpush1.msra.mxu0 0.0
    %823 = vmatprep.mubr.f32.mxu0 0.0
    %824 = vmatmul.mubr.f32.gmra.mrb[0].mxu0 %v757
    %v825 = vpop.f32.mrb[0].mxu0
    %v826 = vadd.f32 0.0, %v825
    %v827 = vpop.f32.mrb[0].mxu0
    %828 = vdwg.mxu0
    %v830 = vrot.slane %v826, 6
    %v832 = vadd.f32 %v224, %v830
    %v833 = vxor.u32 %v832, 2147483648
    %v834 = vmul.f32 %v833, 1.442695
    %v835 = vpow.pop %v834
    %v836 = vadd.f32 %v835, 1.0
    %v837 = vrcp.pop %v836
    %v838 = vmul.f32 1.0, %v837
    %v839 = vtanh.pop %v832
    %v841 = vrot.slane %v747, 6
    %v843 = vmul.f32 %v838, %v841
    %845 = vrot.lane.b32.xlu0 %v839, 64
    %v846 = vpop.permute.xlu0 %845
    %v848 = vmul.f32 %v838, %v846
    %850 = vrot.lane.b32.xlu0 %v848, 32
    %v851 = vpop.permute.xlu0 %850
    %v853 = vadd.f32 %v843, %v851
    %v854 = vtanh.pop %v853
    %856 = vrot.lane.b32.xlu0 %v854, 64
    %v857 = vpop.permute.xlu0 %856
    %v859 = vmul.f32 %v838, %v857
    %v861 = vrot.slane %v859, 2
    %862 = vrot.lane.b32.xlu0 %v861, 32
    %v863 = vpop.permute.xlu0 %862
    %v864 = vsel %vm231, %v863, 0
    %866 = vmatprep.subr.mxu0 0.0
    %867 = vmatpush1.msra.mxu0 %v227
    %868 = vmatprep.subr.mxu0 0.0
    %869 = vmatpush1.msra.mxu0 %v228
    %870 = vmatprep.subr.mxu0 0.0
    %871 = vmatpush1.msra.mxu0 %v229
    %872 = vmatprep.subr.mxu0 0.0
    %873 = vmatpush1.msra.mxu0 %v230
    %874 = vmatprep.subr.mxu0 0.0
    %875 = vmatpush1.msra.mxu0 0.0
    %876 = vmatprep.subr.mxu0 0.0
    %877 = vmatpush1.msra.mxu0 0.0
    %878 = vmatprep.subr.mxu0 0.0
    %879 = vmatpush1.msra.mxu0 0.0
    %880 = vmatprep.subr.mxu0 0.0
    %881 = vmatpush1.msra.mxu0 0.0
    %882 = vmatprep.subr.mxu0 0.0
    %883 = vmatpush1.msra.mxu0 0.0
    %884 = vmatprep.subr.mxu0 0.0
    %885 = vmatpush1.msra.mxu0 0.0
    %886 = vmatprep.subr.mxu0 0.0
    %887 = vmatpush1.msra.mxu0 0.0
    %888 = vmatprep.subr.mxu0 0.0
    %889 = vmatpush1.msra.mxu0 0.0
    %890 = vmatprep.subr.mxu0 0.0
    %891 = vmatpush1.msra.mxu0 0.0
    %892 = vmatprep.subr.mxu0 0.0
    %893 = vmatpush1.msra.mxu0 0.0
    %894 = vmatprep.subr.mxu0 0.0
    %895 = vmatpush1.msra.mxu0 0.0
    %896 = vmatprep.subr.mxu0 0.0
    %897 = vmatpush1.msra.mxu0 0.0
    %898 = vmatprep.subr.mxu0 0.0
    %899 = vmatpush1.msra.mxu0 0.0
    %900 = vmatprep.subr.mxu0 0.0
    %901 = vmatpush1.msra.mxu0 0.0
    %902 = vmatprep.subr.mxu0 0.0
    %903 = vmatpush1.msra.mxu0 0.0
    %904 = vmatprep.subr.mxu0 0.0
    %905 = vmatpush1.msra.mxu0 0.0
    %906 = vmatprep.subr.mxu0 0.0
    %907 = vmatpush1.msra.mxu0 0.0
    %908 = vmatprep.subr.mxu0 0.0
    %909 = vmatpush1.msra.mxu0 0.0
    %910 = vmatprep.subr.mxu0 0.0
    %911 = vmatpush1.msra.mxu0 0.0
    %912 = vmatprep.subr.mxu0 0.0
    %913 = vmatpush1.msra.mxu0 0.0
    %914 = vmatprep.subr.mxu0 0.0
    %915 = vmatpush1.msra.mxu0 0.0
    %916 = vmatprep.subr.mxu0 0.0
    %917 = vmatpush1.msra.mxu0 0.0
    %918 = vmatprep.subr.mxu0 0.0
    %919 = vmatpush1.msra.mxu0 0.0
    %920 = vmatprep.subr.mxu0 0.0
    %921 = vmatpush1.msra.mxu0 0.0
    %922 = vmatprep.subr.mxu0 0.0
    %923 = vmatpush1.msra.mxu0 0.0
    %924 = vmatprep.subr.mxu0 0.0
    %925 = vmatpush1.msra.mxu0 0.0
    %926 = vmatprep.subr.mxu0 0.0
    %927 = vmatpush1.msra.mxu0 0.0
    %928 = vmatprep.subr.mxu0 0.0
    %929 = vmatpush1.msra.mxu0 0.0
    %930 = vmatprep.mubr.f32.mxu0 0.0
    %931 = vmatmul.mubr.f32.gmra.mrb[0].mxu0 %v864
    %v932 = vpop.f32.mrb[0].mxu0
    %v933 = vadd.f32 0.0, %v932
    %v934 = vpop.f32.mrb[0].mxu0
    %935 = vdwg.mxu0
    %v937 = vrot.slane %v933, 4
    %v939 = vadd.f32 %v224, %v937
    %v940 = vxor.u32 %v939, 2147483648
    %v941 = vmul.f32 %v940, 1.442695
    %v942 = vpow.pop %v941
    %v943 = vadd.f32 %v942, 1.0
    %v944 = vrcp.pop %v943
    %v945 = vmul.f32 1.0, %v944
    %v946 = vtanh.pop %v939
    %v948 = vrot.slane %v853, 6
    %v950 = vmul.f32 %v945, %v948
    %952 = vrot.lane.b32.xlu0 %v946, 64
    %v953 = vpop.permute.xlu0 %952
    %v955 = vmul.f32 %v945, %v953
    %957 = vrot.lane.b32.xlu0 %v955, 32
    %v958 = vpop.permute.xlu0 %957
    %v960 = vadd.f32 %v950, %v958
    %v961 = vtanh.pop %v960
    %963 = vrot.lane.b32.xlu0 %v961, 64
    %v964 = vpop.permute.xlu0 %963
    %v966 = vmul.f32 %v945, %v964
    %v968 = vrot.slane %v966, 4
    %969 = vrot.lane.b32.xlu0 %v968, 32
    %v970 = vpop.permute.xlu0 %969
    %v971 = vsel %vm231, %v970, 0
    %973 = vmatprep.subr.mxu0 0.0
    %974 = vmatpush1.msra.mxu0 %v227
    %975 = vmatprep.subr.mxu0 0.0
    %976 = vmatpush1.msra.mxu0 %v228
    %977 = vmatprep.subr.mxu0 0.0
    %978 = vmatpush1.msra.mxu0 %v229
    %979 = vmatprep.subr.mxu0 0.0
    %980 = vmatpush1.msra.mxu0 %v230
    %981 = vmatprep.subr.mxu0 0.0
    %982 = vmatpush1.msra.mxu0 0.0
    %983 = vmatprep.subr.mxu0 0.0
    %984 = vmatpush1.msra.mxu0 0.0
    %985 = vmatprep.subr.mxu0 0.0
    %986 = vmatpush1.msra.mxu0 0.0
    %987 = vmatprep.subr.mxu0 0.0
    %988 = vmatpush1.msra.mxu0 0.0
    %989 = vmatprep.subr.mxu0 0.0
    %990 = vmatpush1.msra.mxu0 0.0
    %991 = vmatprep.subr.mxu0 0.0
    %992 = vmatpush1.msra.mxu0 0.0
    %993 = vmatprep.subr.mxu0 0.0
    %994 = vmatpush1.msra.mxu0 0.0
    %995 = vmatprep.subr.mxu0 0.0
    %996 = vmatpush1.msra.mxu0 0.0
    %997 = vmatprep.subr.mxu0 0.0
    %998 = vmatpush1.msra.mxu0 0.0
    %999 = vmatprep.subr.mxu0 0.0
    %1000 = vmatpush1.msra.mxu0 0.0
    %1001 = vmatprep.subr.mxu0 0.0
    %1002 = vmatpush1.msra.mxu0 0.0
    %1003 = vmatprep.subr.mxu0 0.0
    %1004 = vmatpush1.msra.mxu0 0.0
    %1005 = vmatprep.subr.mxu0 0.0
    %1006 = vmatpush1.msra.mxu0 0.0
    %1007 = vmatprep.subr.mxu0 0.0
    %1008 = vmatpush1.msra.mxu0 0.0
    %1009 = vmatprep.subr.mxu0 0.0
    %1010 = vmatpush1.msra.mxu0 0.0
    %1011 = vmatprep.subr.mxu0 0.0
    %1012 = vmatpush1.msra.mxu0 0.0
    %1013 = vmatprep.subr.mxu0 0.0
    %1014 = vmatpush1.msra.mxu0 0.0
    %1015 = vmatprep.subr.mxu0 0.0
    %1016 = vmatpush1.msra.mxu0 0.0
    %1017 = vmatprep.subr.mxu0 0.0
    %1018 = vmatpush1.msra.mxu0 0.0
    %1019 = vmatprep.subr.mxu0 0.0
    %1020 = vmatpush1.msra.mxu0 0.0
    %1021 = vmatprep.subr.mxu0 0.0
    %1022 = vmatpush1.msra.mxu0 0.0
    %1023 = vmatprep.subr.mxu0 0.0
    %1024 = vmatpush1.msra.mxu0 0.0
    %1025 = vmatprep.subr.mxu0 0.0
    %1026 = vmatpush1.msra.mxu0 0.0
    %1027 = vmatprep.subr.mxu0 0.0
    %1028 = vmatpush1.msra.mxu0 0.0
    %1029 = vmatprep.subr.mxu0 0.0
    %1030 = vmatpush1.msra.mxu0 0.0
    %1031 = vmatprep.subr.mxu0 0.0
    %1032 = vmatpush1.msra.mxu0 0.0
    %1033 = vmatprep.subr.mxu0 0.0
    %1034 = vmatpush1.msra.mxu0 0.0
    %1035 = vmatprep.subr.mxu0 0.0
    %1036 = vmatpush1.msra.mxu0 0.0
    %1037 = vmatprep.mubr.f32.mxu0 0.0
    %1038 = vmatmul.mubr.f32.gmra.mrb[0].mxu0 %v971
    %v1039 = vpop.f32.mrb[0].mxu0
    %v1040 = vadd.f32 0.0, %v1039
    %v1041 = vpop.f32.mrb[0].mxu0
    %1042 = vdwg.mxu0
    %v1044 = vrot.slane %v1040, 2
    %v1046 = vadd.f32 %v224, %v1044
    %v1047 = vxor.u32 %v1046, 2147483648
    %v1048 = vmul.f32 %v1047, 1.442695
    %v1049 = vpow.pop %v1048
    %v1050 = vadd.f32 %v1049, 1.0
    %v1051 = vrcp.pop %v1050
    %v1052 = vmul.f32 1.0, %v1051
    %v1053 = vtanh.pop %v1046
    %v1055 = vrot.slane %v960, 6
    %v1057 = vmul.f32 %v1052, %v1055
    %1059 = vrot.lane.b32.xlu0 %v1053, 64
    %v1060 = vpop.permute.xlu0 %1059
    %v1062 = vmul.f32 %v1052, %v1060
    %1064 = vrot.lane.b32.xlu0 %v1062, 32
    %v1065 = vpop.permute.xlu0 %1064
    %v1067 = vadd.f32 %v1057, %v1065
    %v1068 = vtanh.pop %v1067
    %1070 = vrot.lane.b32.xlu0 %v1068, 64
    %v1071 = vpop.permute.xlu0 %1070
    %v1073 = vmul.f32 %v1052, %v1071
    %v1074 = vld [vmem:[%s5] sm:$0xff]
    %v1075 = vld [vmem:[%s5 + $0x8] sm:$0xff]
    %v1076 = vld [vmem:[%s5 + $0x10] sm:$0xff]
    %v1077 = vld [vmem:[%s5 + $0x18] sm:$0xff]
    %v1078 = vld [vmem:[%s6] sm:$0x1]
    %v1080 = vlaneseq
    %v1081 = vshrl.u32 %v1080, 7
    %v1082 = vsub.s32 0, %v1081
    %v1083 = vrot.slane %v1078, %v1082
    %v1086 = vrot.slane %v1073, 6
    %1087 = vrot.lane.b32.xlu0 %v1086, 32
    %v1088 = vpop.permute.xlu0 %1087
    %v1089 = vsel %vm231, %v1088, 0
    %1091 = vmatprep.subr.mxu0 0.0
    %1092 = vmatpush1.msra.mxu0 %v1074
    %1093 = vmatprep.subr.mxu0 0.0
    %1094 = vmatpush1.msra.mxu0 %v1075
    %1095 = vmatprep.subr.mxu0 0.0
    %1096 = vmatpush1.msra.mxu0 %v1076
    %1097 = vmatprep.subr.mxu0 0.0
    %1098 = vmatpush1.msra.mxu0 %v1077
    %1099 = vmatprep.subr.mxu0 0.0
    %1100 = vmatpush1.msra.mxu0 0.0
    %1101 = vmatprep.subr.mxu0 0.0
    %1102 = vmatpush1.msra.mxu0 0.0
    %1103 = vmatprep.subr.mxu0 0.0
    %1104 = vmatpush1.msra.mxu0 0.0
    %1105 = vmatprep.subr.mxu0 0.0
    %1106 = vmatpush1.msra.mxu0 0.0
    %1107 = vmatprep.subr.mxu0 0.0
    %1108 = vmatpush1.msra.mxu0 0.0
    %1109 = vmatprep.subr.mxu0 0.0
    %1110 = vmatpush1.msra.mxu0 0.0
    %1111 = vmatprep.subr.mxu0 0.0
    %1112 = vmatpush1.msra.mxu0 0.0
    %1113 = vmatprep.subr.mxu0 0.0
    %1114 = vmatpush1.msra.mxu0 0.0
    %1115 = vmatprep.subr.mxu0 0.0
    %1116 = vmatpush1.msra.mxu0 0.0
    %1117 = vmatprep.subr.mxu0 0.0
    %1118 = vmatpush1.msra.mxu0 0.0
    %1119 = vmatprep.subr.mxu0 0.0
    %1120 = vmatpush1.msra.mxu0 0.0
    %1121 = vmatprep.subr.mxu0 0.0
    %1122 = vmatpush1.msra.mxu0 0.0
    %1123 = vmatprep.subr.mxu0 0.0
    %1124 = vmatpush1.msra.mxu0 0.0
    %1125 = vmatprep.subr.mxu0 0.0
    %1126 = vmatpush1.msra.mxu0 0.0
    %1127 = vmatprep.subr.mxu0 0.0
    %1128 = vmatpush1.msra.mxu0 0.0
    %1129 = vmatprep.subr.mxu0 0.0
    %1130 = vmatpush1.msra.mxu0 0.0
    %1131 = vmatprep.subr.mxu0 0.0
    %1132 = vmatpush1.msra.mxu0 0.0
    %1133 = vmatprep.subr.mxu0 0.0
    %1134 = vmatpush1.msra.mxu0 0.0
    %1135 = vmatprep.subr.mxu0 0.0
    %1136 = vmatpush1.msra.mxu0 0.0
    %1137 = vmatprep.subr.mxu0 0.0
    %1138 = vmatpush1.msra.mxu0 0.0
    %1139 = vmatprep.subr.mxu0 0.0
    %1140 = vmatpush1.msra.mxu0 0.0
    %1141 = vmatprep.subr.mxu0 0.0
    %1142 = vmatpush1.msra.mxu0 0.0
    %1143 = vmatprep.subr.mxu0 0.0
    %1144 = vmatpush1.msra.mxu0 0.0
    %1145 = vmatprep.subr.mxu0 0.0
    %1146 = vmatpush1.msra.mxu0 0.0
    %1147 = vmatprep.subr.mxu0 0.0
    %1148 = vmatpush1.msra.mxu0 0.0
    %1149 = vmatprep.subr.mxu0 0.0
    %1150 = vmatpush1.msra.mxu0 0.0
    %1151 = vmatprep.subr.mxu0 0.0
    %1152 = vmatpush1.msra.mxu0 0.0
    %1153 = vmatprep.subr.mxu0 0.0
    %1154 = vmatpush1.msra.mxu0 0.0
    %1155 = vmatprep.mubr.f32.mxu0 0.0
    %1156 = vmatmul.mubr.f32.gmra.mrb[0].mxu0 %v1089
    %v1157 = vpop.f32.mrb[0].mxu0
    %v1158 = vadd.f32 %v1083, %v1157
    %v1159 = vpop.f32.mrb[0].mxu0
    %1160 = vdwg.mxu0
    %vm1161 = vcmask 9216
    %v1162 = vsel %vm1161, %v1158, -inf
    %1163 = vmax.xlane.f32.xlu0 %v1162
    %v1164 = vpop.xlane.xlu0 %1163
    %v1165 = vsub.f32 %v1158, %v1164
    %v1166 = vmul.f32 %v1165, 1.442695
    %v1167 = vpow.pop %v1166
    %v1168 = vsel %vm1161, %v1167, 0.0
    %1169 = vadd.xlane.f32.xlu0 %v1168
    %v1170 = vpop.xlane.xlu0 %1169
    %v1171 = vlog2.pop %v1170
    %v1172 = vmul.f32 %v1171, 0.6931472
    %v1173 = vadd.f32 %v1172, %v1164
    %v1174 = vsub.f32 %v1158, %v1173
    %1175 = vst.msk [vmem:[#allocation2] sm:$0x3] %vm1161, %v1174
    // Predicated region
    $region30: #{tpu_custom_call.1} parent=1 // pred_check
      _
    $region31: #{tpu_custom_call.1} parent=1 // pred_check_branch
      %1177 = sbr.rel (0) target = $region33
    $region32: #{tpu_custom_call.1} parent=1 // pred_region
      %s1179 = ssub.s32 32, 32
      %1180 = vsyncadd [#allocation3], %s1179
      %s1182 = sshll.u32 [#allocation2], 4
      %s1183 = int_to_ptr.vmem [resolvable:$true] %s1182
      %1185 = dma.vmem_to_hbm [thread:$0]  %s1183, 32, %s7, [#allocation3]
    $region33: #{tpu_custom_call.1} parent=1 // pred_fallthru
      _
    // Predicated region
    $region34: #{tpu_custom_call.1} parent=1 // pred_check
      _
    $region35: #{tpu_custom_call.1} parent=1 // pred_check_branch
      %1187 = sbr.rel (0) target = $region37
    $region36: #{tpu_custom_call.1} parent=1 // pred_region
      %1188 = dma.done [#allocation3], 32
    $region37: #{tpu_custom_call.1} parent=1 // pred_fallthru
      _
    %1189 = vsyncpa [#allocation3], 1

</llo_original>
